<compile_context>
chip_gen: v7x
topology: tpu7x:2x2x1
jax: 0.10.0
libtpu: 0.0.40
codegen_flags: <defaults>
</compile_context>

<pallas_src>
import math

import jax
import jax.numpy as jnp
from jax.experimental import pallas as pl
from jax.experimental.pallas import tpu as pltpu


# ----------------------------------------------------------------------------
# Per-generation knobs.
# ----------------------------------------------------------------------------
def _device_kind():
    try:
        return jax.devices()[0].device_kind.lower()
    except Exception:
        return ""


_IS_V7 = "v7" in _device_kind()
# v7x has 64 MiB VMEM per TensorCore -> stay well under; 128 MiB on v5e/v6e.
_VMEM_LIMIT = (48 if _IS_V7 else 96) * 1024 * 1024
_TILE_CAP = 128 if _IS_V7 else 256


def _pick_tile(total, cap):
    """Largest divisor of `total` that is <= cap and a multiple of 8 (else `total`)."""
    if total <= cap:
        return total
    for t in range(cap, 7, -1):
        if total % t == 0 and t % 8 == 0:
            return t
    return total  # fallback: no tiling


# ----------------------------------------------------------------------------
# Kernel 1: fused QKV projection, once per head (no recompute per query tile).
# grid = (H, num_r); head weights stay resident while row tiles stream.
# ----------------------------------------------------------------------------
def _qkv_proj_kernel(x_ref, w_ref, b_ref, q_ref, k_ref, v_ref):
    d = q_ref.shape[-1]
    # nn.Linear: y = x @ W.T + b  (W pre-transposed to (in,out) in the wrapper;
    # q part already scaled by 1/sqrt(D)).
    y = jnp.dot(x_ref[...], w_ref[0],
                preferred_element_type=jnp.float32) + b_ref[0]
    q_ref[0] = y[:, :d].astype(q_ref.dtype)
    k_ref[0] = y[:, d:2 * d].astype(k_ref.dtype)
    v_ref[0] = y[:, 2 * d:].astype(v_ref.dtype)


def qkv_projection(x_rows, wqkv, bqkv, *, tr=None):
    """x_rows: (R,D) bf16; wqkv: (H,D,3D) bf16 (in,out); bqkv: (H,1,3D) f32.

    Returns (q, k, v), each (H, R, D) bf16."""
    R, D = x_rows.shape
    H = wqkv.shape[0]
    if tr is None:
        tr = _pick_tile(R, _TILE_CAP)
    num_r = R // tr

    cost = pl.CostEstimate(
        flops=int(6 * H * R * D * D),
        transcendentals=0,
        bytes_accessed=int(H * R * D * 2 + 3 * H * D * D * 2
                           + 3 * H * D * 4 + 3 * H * R * D * 2),
    )

    out_sds = jax.ShapeDtypeStruct((H, R, D), jnp.bfloat16)
    qkv_out_spec = pl.BlockSpec((1, tr, D), lambda h, r: (h, r, 0))
    return pl.pallas_call(
        _qkv_proj_kernel,
        out_shape=(out_sds, out_sds, out_sds),
        grid_spec=pltpu.PrefetchScalarGridSpec(
            num_scalar_prefetch=0,
            grid=(H, num_r),  # rows innermost: head weights resident across rows
            in_specs=[
                pl.BlockSpec((tr, D), lambda h, r: (r, 0)),
                pl.BlockSpec((1, D, 3 * D), lambda h, r: (h, 0, 0)),
                pl.BlockSpec((1, 1, 3 * D), lambda h, r: (h, 0, 0)),
            ],
            out_specs=[qkv_out_spec, qkv_out_spec, qkv_out_spec],
        ),
        compiler_params=pltpu.CompilerParams(
            dimension_semantics=("parallel", "parallel"),
            vmem_limit_bytes=_VMEM_LIMIT),
        cost_estimate=cost,
    )(x_rows, wqkv, bqkv)


# ----------------------------------------------------------------------------
# Kernel 2: flash-style attention over KV tiles, summed over heads, with the
# feedforward MLP fused into the last-head / last-kv epilogue.
# grid = (num_q "parallel", H "arbitrary", num_kv "arbitrary").
# ----------------------------------------------------------------------------
def _attn_ffn_kernel(q_ref, k_ref, v_ref, w1_ref, b1_ref, w2_ref, b2_ref,
                     o_ref, m_ref, l_ref, acc_ref, hsum_ref):
    h = pl.program_id(1)
    kv = pl.program_id(2)
    last_h = pl.num_programs(1) - 1
    last_kv = pl.num_programs(2) - 1

    @pl.when(jnp.logical_and(h == 0, kv == 0))
    def _():
        hsum_ref[...] = jnp.zeros_like(hsum_ref)

    @pl.when(kv == 0)
    def _():
        m_ref[...] = jnp.full_like(m_ref, -jnp.inf)
        l_ref[...] = jnp.zeros_like(l_ref)
        acc_ref[...] = jnp.zeros_like(acc_ref)

    q = q_ref[0]          # (B, tq, D) bf16, scale already folded into wq/bq
    k = k_ref[0]          # (B, tk, D) bf16
    v = v_ref[0]          # (B, tk, D) bf16

    # scores = q @ k^T (bf16 MXU operands, f32 accumulation)
    s = jnp.einsum('bqd,bkd->bqk', q, k, preferred_element_type=jnp.float32)

    # online (flash) softmax in f32
    m_new = jnp.maximum(m_ref[...], jnp.max(s, axis=-1, keepdims=True))
    alpha = jnp.exp(m_ref[...] - m_new)
    p = jnp.exp(s - m_new)
    l_ref[...] = alpha * l_ref[...] + jnp.sum(p, axis=-1, keepdims=True)
    acc_ref[...] = alpha * acc_ref[...] + jnp.einsum(
        'bqk,bkd->bqd', p.astype(jnp.bfloat16), v,
        preferred_element_type=jnp.float32)
    m_ref[...] = m_new

    @pl.when(kv == last_kv)
    def _():
        # finalize this head and add into the head-sum accumulator
        hsum_ref[...] += acc_ref[...] * pl.reciprocal(l_ref[...], approx=True)

    @pl.when(jnp.logical_and(h == last_h, kv == last_kv))
    def _():
        # fused feedforward: Linear(D->F) -> ReLU -> Linear(F->D)
        b, tq, d = o_ref.shape
        hs = hsum_ref[...].reshape(b * tq, d).astype(jnp.bfloat16)
        hid = jnp.dot(hs, w1_ref[...],
                      preferred_element_type=jnp.float32) + b1_ref[...]
        hid = jnp.maximum(hid, 0.0)                                 # nn.ReLU
        out = jnp.dot(hid.astype(jnp.bfloat16), w2_ref[...],
                      preferred_element_type=jnp.float32) + b2_ref[...]
        o_ref[...] = out.reshape(b, tq, d).astype(o_ref.dtype)


def attention_ffn(q, k, v, w1t, b1, w2t, b2, *, tq=None, tk=None):
    """q/k/v: (H,B,S,D) bf16; w1t: (D,F) bf16; w2t: (F,D) bf16; biases f32 (1,·)."""
    H, B, S, D = q.shape
    F = w1t.shape[1]
    if tq is None:
        tq = _pick_tile(S, _TILE_CAP)
        if _IS_V7 and tq == S and S % 16 == 0:
            tq = S // 2  # >=2 "parallel" query tiles so both v7x TensorCores work
    if tk is None:
        tk = _pick_tile(S, _TILE_CAP)
    num_q = S // tq
    num_kv = S // tk

    cost = pl.CostEstimate(
        flops=int(4 * H * B * S * S * D + 4 * B * S * D * F),
        transcendentals=int(H * B * S * S + H * B * S * num_kv),
        bytes_accessed=int(H * B * S * D * 2                    # q
                           + 2 * num_q * H * B * S * D * 2      # k, v streamed per q tile
                           + 2 * D * F * 2 + (F + D) * 4        # ffn weights/biases
                           + B * S * D * 2),                    # output
    )

    return pl.pallas_call(
        _attn_ffn_kernel,
        out_shape=jax.ShapeDtypeStruct((B, S, D), jnp.bfloat16),
        grid_spec=pltpu.PrefetchScalarGridSpec(
            num_scalar_prefetch=0,
            grid=(num_q, H, num_kv),
            in_specs=[
                pl.BlockSpec((1, B, tq, D), lambda i, h, kv: (h, 0, i, 0)),
                pl.BlockSpec((1, B, tk, D), lambda i, h, kv: (h, 0, kv, 0)),
                pl.BlockSpec((1, B, tk, D), lambda i, h, kv: (h, 0, kv, 0)),
                # constant-index resident operands: single buffer is enough
                pl.BlockSpec((D, F), lambda i, h, kv: (0, 0),
                             pipeline_mode=pl.Buffered(1)),
                pl.BlockSpec((1, F), lambda i, h, kv: (0, 0),
                             pipeline_mode=pl.Buffered(1)),
                pl.BlockSpec((F, D), lambda i, h, kv: (0, 0),
                             pipeline_mode=pl.Buffered(1)),
                pl.BlockSpec((1, D), lambda i, h, kv: (0, 0),
                             pipeline_mode=pl.Buffered(1)),
            ],
            out_specs=pl.BlockSpec((B, tq, D), lambda i, h, kv: (0, i, 0)),
            scratch_shapes=[
                pltpu.VMEM((B, tq, 1), jnp.float32),   # running max
                pltpu.VMEM((B, tq, 1), jnp.float32),   # running sum
                pltpu.VMEM((B, tq, D), jnp.float32),   # per-head flash accumulator
                pltpu.VMEM((B, tq, D), jnp.float32),   # sum over heads
            ],
        ),
        compiler_params=pltpu.CompilerParams(
            dimension_semantics=("parallel", "arbitrary", "arbitrary"),
            vmem_limit_bytes=_VMEM_LIMIT),
        cost_estimate=cost,
    )(q, k, v, w1t, b1, w2t, b2)


# ----------------------------------------------------------------------------
# Bert wrapper (parameters kept in PyTorch nn.Linear layout: W (out,in), b (out,))
# ----------------------------------------------------------------------------
def init_bert_params(key, hidden_dim, num_attention_heads, ffn_dim):
    ks = jax.random.split(key, 10)
    s = 0.02
    H, D, F = num_attention_heads, hidden_dim, ffn_dim
    return {
        "wq": s * jax.random.normal(ks[0], (H, D, D), jnp.float32),
        "bq": s * jax.random.normal(ks[1], (H, D), jnp.float32),
        "wk": s * jax.random.normal(ks[2], (H, D, D), jnp.float32),
        "bk": s * jax.random.normal(ks[3], (H, D), jnp.float32),
        "wv": s * jax.random.normal(ks[4], (H, D, D), jnp.float32),
        "bv": s * jax.random.normal(ks[5], (H, D), jnp.float32),
        "w1": s * jax.random.normal(ks[6], (F, D), jnp.float32),
        "b1": s * jax.random.normal(ks[7], (F,), jnp.float32),
        "w2": s * jax.random.normal(ks[8], (D, F), jnp.float32),
        "b2": s * jax.random.normal(ks[9], (D,), jnp.float32),
    }


@jax.jit
def bert_forward(params, x):
    B, S, D = x.shape
    H = params["wq"].shape[0]
    scale = 1.0 / math.sqrt(float(D))

    # Wrapper-side prep (free XLA ops): transpose weights to (in,out), fold the
    # 1/sqrt(D) softmax scale into wq/bq, stack q|k|v along the output dim, and
    # cast matmul operands to bf16 (biases stay f32).
    wqkv = jnp.concatenate([params["wq"].transpose(0, 2, 1) * scale,
                            params["wk"].transpose(0, 2, 1),
                            params["wv"].transpose(0, 2, 1)],
                           axis=-1).astype(jnp.bfloat16)              # (H, D, 3D)
    bqkv = jnp.concatenate([params["bq"] * scale, params["bk"], params["bv"]],
                           axis=-1)[:, None, :]                        # (H, 1, 3D) f32

    q, k, v = qkv_projection(x.reshape(B * S, D).astype(jnp.bfloat16), wqkv, bqkv)
    q = q.reshape(H, B, S, D)
    k = k.reshape(H, B, S, D)
    v = v.reshape(H, B, S, D)

    out = attention_ffn(
        q, k, v,
        params["w1"].T.astype(jnp.bfloat16), params["b1"][None, :],
        params["w2"].T.astype(jnp.bfloat16), params["b2"][None, :])
    return out  # (B, S, D) bf16


# Pure-JAX f32 reference (PyTorch semantics) for the correctness check.
def bert_reference(params, x):
    D = x.shape[-1]
    H = params["wq"].shape[0]
    acc = jnp.zeros_like(x)
    for h in range(H):
        q = x @ params["wq"][h].T + params["bq"][h]
        k = x @ params["wk"][h].T + params["bk"][h]
        v = x @ params["wv"][h].T + params["bv"][h]
        scores = jnp.einsum('bqd,bkd->bqk', q, k) / (D ** 0.5)
        attn = jax.nn.softmax(scores, axis=-1)
        acc = acc + jnp.einsum('bqk,bkd->bqd', attn, v)
    h1 = jnp.maximum(acc @ params["w1"].T + params["b1"], 0.0)
    return h1 @ params["w2"].T + params["b2"]


if __name__ == "__main__":
    B, S, D = 2, 8, 32          # batch, seq, hidden
    H = 4                        # num_attention_heads
    F = 64                       # feedforward hidden dim
    # NOTE: real BERT dims (D=768, F=3072, S multiple of 128) give lane-dense
    # stores and full MXU tiles; the tiny demo shapes above just exercise
    # correctness.

    key = jax.random.PRNGKey(0)
    kx, kp = jax.random.split(key)
    x = jax.random.normal(kx, (B, S, D), jnp.float32)
    params = init_bert_params(kp, D, H, F)

    out = jax.block_until_ready(bert_forward(params, x))
    ref = bert_reference(params, x)

    assert out.shape == (B, S, D)
    # bf16 matmul operands / bf16 output + approx reciprocal -> relaxed tolerance.
    assert jnp.allclose(out.astype(jnp.float32), ref, atol=1e-2, rtol=1e-2), \
        "mismatch vs reference"

    print("KERNEL_OK")
</pallas_src>

<mosaic_0001>
module attributes {stable_mosaic.version = 11 : i64} {
  func.func @_qkv_proj_kernel(%arg0: i32, %arg1: i32, %arg2: memref<16x32xbf16, #tpu.memory_space<vmem>>, %arg3: memref<1x32x96xbf16, #tpu.memory_space<vmem>>, %arg4: memref<1x1x96xf32, #tpu.memory_space<vmem>>, %arg5: memref<1x16x32xbf16, #tpu.memory_space<vmem>>, %arg6: memref<1x16x32xbf16, #tpu.memory_space<vmem>>, %arg7: memref<1x16x32xbf16, #tpu.memory_space<vmem>>) attributes {dimension_semantics = [#tpu.dimension_semantics<parallel>, #tpu.dimension_semantics<parallel>], iteration_bounds = array<i64: 4, 1>, scalar_prefetch = 0 : i64, scratch_operands = 0 : i64, tpu.core_type = #tpu.core_type<tc>, window_params = [{transform_indices = @transform_0, window_bounds = array<i64: 16, 32>}, {transform_indices = @transform_1, window_bounds = array<i64: 1, 32, 96>}, {transform_indices = @transform_2, window_bounds = array<i64: 1, 1, 96>}, {transform_indices = @transform_3, window_bounds = array<i64: 1, 16, 32>}, {transform_indices = @transform_4, window_bounds = array<i64: 1, 16, 32>}, {transform_indices = @transform_5, window_bounds = array<i64: 1, 16, 32>}]} {
    %c0 = arith.constant 0 : index
    %c0_0 = arith.constant 0 : index
    %0 = vector.load %arg2[%c0, %c0_0] : memref<16x32xbf16, #tpu.memory_space<vmem>>, vector<16x32xbf16>
    %c0_1 = arith.constant 0 : index
    %c0_2 = arith.constant 0 : index
    %c0_3 = arith.constant 0 : index
    %1 = vector.load %arg3[%c0_1, %c0_2, %c0_3] : memref<1x32x96xbf16, #tpu.memory_space<vmem>>, vector<1x32x96xbf16>
    %2 = vector.shape_cast %1 : vector<1x32x96xbf16> to vector<32x96xbf16>
    %cst = arith.constant dense<0.000000e+00> : vector<16x96xf32>
    %3 = tpu.matmul %0, %2, %cst {dimension_numbers = #tpu.dot_dimension_numbers<[1], [0], [0], [1], [0, 0, 1, 1], [], []>} : vector<16x32xbf16>, vector<32x96xbf16>, vector<16x96xf32> -> vector<16x96xf32>
    %c0_4 = arith.constant 0 : index
    %c0_5 = arith.constant 0 : index
    %c0_6 = arith.constant 0 : index
    %4 = vector.load %arg4[%c0_4, %c0_5, %c0_6] : memref<1x1x96xf32, #tpu.memory_space<vmem>>, vector<1x1x96xf32>
    %5 = vector.shape_cast %4 : vector<1x1x96xf32> to vector<1x96xf32>
    %6 = vector.broadcast %5 : vector<1x96xf32> to vector<16x96xf32>
    %7 = arith.addf %3, %6 : vector<16x96xf32>
    %8 = vector.extract_strided_slice %7 {offsets = [0, 0], sizes = [16, 32], strides = [1, 1]} : vector<16x96xf32> to vector<16x32xf32>
    %9 = arith.truncf %8 : vector<16x32xf32> to vector<16x32xbf16>
    %c0_7 = arith.constant 0 : index
    %c0_8 = arith.constant 0 : index
    %c0_9 = arith.constant 0 : index
    %10 = vector.load %arg5[%c0_7, %c0_8, %c0_9] : memref<1x16x32xbf16, #tpu.memory_space<vmem>>, vector<1x16x32xbf16>
    %11 = vector.shape_cast %10 : vector<1x16x32xbf16> to vector<16x32xbf16>
    %12 = vector.shape_cast %9 : vector<16x32xbf16> to vector<1x16x32xbf16>
    tpu.vector_store %arg5[%c0_7, %c0_8, %c0_9], %12 {strides = array<i32>} : memref<1x16x32xbf16, #tpu.memory_space<vmem>>, vector<1x16x32xbf16>,
    %13 = vector.extract_strided_slice %7 {offsets = [0, 32], sizes = [16, 32], strides = [1, 1]} : vector<16x96xf32> to vector<16x32xf32>
    %14 = arith.truncf %13 : vector<16x32xf32> to vector<16x32xbf16>
    %c0_10 = arith.constant 0 : index
    %c0_11 = arith.constant 0 : index
    %c0_12 = arith.constant 0 : index
    %15 = vector.load %arg6[%c0_10, %c0_11, %c0_12] : memref<1x16x32xbf16, #tpu.memory_space<vmem>>, vector<1x16x32xbf16>
    %16 = vector.shape_cast %15 : vector<1x16x32xbf16> to vector<16x32xbf16>
    %17 = vector.shape_cast %14 : vector<16x32xbf16> to vector<1x16x32xbf16>
    tpu.vector_store %arg6[%c0_10, %c0_11, %c0_12], %17 {strides = array<i32>} : memref<1x16x32xbf16, #tpu.memory_space<vmem>>, vector<1x16x32xbf16>,
    %18 = vector.extract_strided_slice %7 {offsets = [0, 64], sizes = [16, 32], strides = [1, 1]} : vector<16x96xf32> to vector<16x32xf32>
    %19 = arith.truncf %18 : vector<16x32xf32> to vector<16x32xbf16>
    %c0_13 = arith.constant 0 : index
    %c0_14 = arith.constant 0 : index
    %c0_15 = arith.constant 0 : index
    %20 = vector.load %arg7[%c0_13, %c0_14, %c0_15] : memref<1x16x32xbf16, #tpu.memory_space<vmem>>, vector<1x16x32xbf16>
    %21 = vector.shape_cast %20 : vector<1x16x32xbf16> to vector<16x32xbf16>
    %22 = vector.shape_cast %19 : vector<16x32xbf16> to vector<1x16x32xbf16>
    tpu.vector_store %arg7[%c0_13, %c0_14, %c0_15], %22 {strides = array<i32>} : memref<1x16x32xbf16, #tpu.memory_space<vmem>>, vector<1x16x32xbf16>,
    return
  }
  func.func @transform_0(%arg0: i32, %arg1: i32) -> (i32, i32) {
    %c0_i32 = arith.constant 0 : i32
    %c0_i32_0 = arith.constant 0 : i32
    return %arg1, %c0_i32 : i32, i32
  }
  func.func @transform_1(%arg0: i32, %arg1: i32) -> (i32, i32, i32) {
    %c0_i32 = arith.constant 0 : i32
    %c0_i32_0 = arith.constant 0 : i32
    %c0_i32_1 = arith.constant 0 : i32
    return %arg0, %c0_i32, %c0_i32_0 : i32, i32, i32
  }
  func.func @transform_2(%arg0: i32, %arg1: i32) -> (i32, i32, i32) {
    %c0_i32 = arith.constant 0 : i32
    %c0_i32_0 = arith.constant 0 : i32
    %c0_i32_1 = arith.constant 0 : i32
    return %arg0, %c0_i32, %c0_i32_0 : i32, i32, i32
  }
  func.func @transform_3(%arg0: i32, %arg1: i32) -> (i32, i32, i32) {
    %c0_i32 = arith.constant 0 : i32
    %c0_i32_0 = arith.constant 0 : i32
    return %arg0, %arg1, %c0_i32 : i32, i32, i32
  }
  func.func @transform_4(%arg0: i32, %arg1: i32) -> (i32, i32, i32) {
    %c0_i32 = arith.constant 0 : i32
    %c0_i32_0 = arith.constant 0 : i32
    return %arg0, %arg1, %c0_i32 : i32, i32, i32
  }
  func.func @transform_5(%arg0: i32, %arg1: i32) -> (i32, i32, i32) {
    %c0_i32 = arith.constant 0 : i32
    %c0_i32_0 = arith.constant 0 : i32
    return %arg0, %arg1, %c0_i32 : i32, i32, i32
  }
}

module attributes {stable_mosaic.version = 11 : i64} {
  func.func @_attn_ffn_kernel(%arg0: i32, %arg1: i32, %arg2: i32, %arg3: memref<1x2x8x32xbf16, #tpu.memory_space<vmem>>, %arg4: memref<1x2x8x32xbf16, #tpu.memory_space<vmem>>, %arg5: memref<1x2x8x32xbf16, #tpu.memory_space<vmem>>, %arg6: memref<32x64xbf16, #tpu.memory_space<vmem>>, %arg7: memref<1x64xf32, #tpu.memory_space<vmem>>, %arg8: memref<64x32xbf16, #tpu.memory_space<vmem>>, %arg9: memref<1x32xf32, #tpu.memory_space<vmem>>, %arg10: memref<2x8x32xbf16, #tpu.memory_space<vmem>>, %arg11: memref<2x8x1xf32, #tpu.memory_space<vmem>>, %arg12: memref<2x8x1xf32, #tpu.memory_space<vmem>>, %arg13: memref<2x8x32xf32, #tpu.memory_space<vmem>>, %arg14: memref<2x8x32xf32, #tpu.memory_space<vmem>>) attributes {dimension_semantics = [#tpu.dimension_semantics<parallel>, #tpu.dimension_semantics<arbitrary>, #tpu.dimension_semantics<arbitrary>], iteration_bounds = array<i64: 1, 4, 1>, scalar_prefetch = 0 : i64, scratch_operands = 4 : i64, tpu.core_type = #tpu.core_type<tc>, window_params = [{transform_indices = @transform_0, window_bounds = array<i64: 1, 2, 8, 32>}, {transform_indices = @transform_1, window_bounds = array<i64: 1, 2, 8, 32>}, {transform_indices = @transform_2, window_bounds = array<i64: 1, 2, 8, 32>}, {pipeline_mode = #tpu.pipeline_mode<synchronous>, transform_indices = @transform_3, window_bounds = array<i64: 32, 64>}, {pipeline_mode = #tpu.pipeline_mode<synchronous>, transform_indices = @transform_4, window_bounds = array<i64: 1, 64>}, {pipeline_mode = #tpu.pipeline_mode<synchronous>, transform_indices = @transform_5, window_bounds = array<i64: 64, 32>}, {pipeline_mode = #tpu.pipeline_mode<synchronous>, transform_indices = @transform_6, window_bounds = array<i64: 1, 32>}, {transform_indices = @transform_7, window_bounds = array<i64: 2, 8, 32>}]} {
    %c0_i32 = arith.constant 0 : i32
    %0 = arith.cmpi eq, %arg1, %c0_i32 : i32
    %c0_i32_0 = arith.constant 0 : i32
    %1 = arith.cmpi eq, %arg2, %c0_i32_0 : i32
    %2 = arith.andi %0, %1 : i1
    %3 = arith.extui %2 : i1 to i32
    %c0_i32_1 = arith.constant 0 : i32
    %4 = arith.cmpi ne, %3, %c0_i32_1 : i32
    scf.if %4 {
      %cst_43 = arith.constant 0.000000e+00 : f32
      %47 = vector.broadcast %cst_43 : f32 to vector<2x8x32xf32>
      %c0_44 = arith.constant 0 : index
      %c0_45 = arith.constant 0 : index
      %c0_46 = arith.constant 0 : index
      %48 = vector.load %arg14[%c0_44, %c0_45, %c0_46] : memref<2x8x32xf32, #tpu.memory_space<vmem>>, vector<2x8x32xf32>
      tpu.vector_store %arg14[%c0_44, %c0_45, %c0_46], %47 {strides = array<i32>} : memref<2x8x32xf32, #tpu.memory_space<vmem>>, vector<2x8x32xf32>,
    } else {
    }
    %c0_i32_2 = arith.constant 0 : i32
    %5 = arith.cmpi eq, %arg2, %c0_i32_2 : i32
    %6 = arith.extui %5 : i1 to i32
    %c0_i32_3 = arith.constant 0 : i32
    %7 = arith.cmpi ne, %6, %c0_i32_3 : i32
    scf.if %7 {
      %cst_43 = arith.constant 0xFF800000 : f32
      %47 = vector.broadcast %cst_43 : f32 to vector<2x8x1xf32>
      %c0_44 = arith.constant 0 : index
      %c0_45 = arith.constant 0 : index
      %c0_46 = arith.constant 0 : index
      %48 = vector.load %arg11[%c0_44, %c0_45, %c0_46] : memref<2x8x1xf32, #tpu.memory_space<vmem>>, vector<2x8x1xf32>
      tpu.vector_store %arg11[%c0_44, %c0_45, %c0_46], %47 {strides = array<i32>} : memref<2x8x1xf32, #tpu.memory_space<vmem>>, vector<2x8x1xf32>,
      %cst_47 = arith.constant 0.000000e+00 : f32
      %49 = vector.broadcast %cst_47 : f32 to vector<2x8x1xf32>
      %c0_48 = arith.constant 0 : index
      %c0_49 = arith.constant 0 : index
      %c0_50 = arith.constant 0 : index
      %50 = vector.load %arg12[%c0_48, %c0_49, %c0_50] : memref<2x8x1xf32, #tpu.memory_space<vmem>>, vector<2x8x1xf32>
      tpu.vector_store %arg12[%c0_48, %c0_49, %c0_50], %49 {strides = array<i32>} : memref<2x8x1xf32, #tpu.memory_space<vmem>>, vector<2x8x1xf32>,
      %cst_51 = arith.constant 0.000000e+00 : f32
      %51 = vector.broadcast %cst_51 : f32 to vector<2x8x32xf32>
      %c0_52 = arith.constant 0 : index
      %c0_53 = arith.constant 0 : index
      %c0_54 = arith.constant 0 : index
      %52 = vector.load %arg13[%c0_52, %c0_53, %c0_54] : memref<2x8x32xf32, #tpu.memory_space<vmem>>, vector<2x8x32xf32>
      tpu.vector_store %arg13[%c0_52, %c0_53, %c0_54], %51 {strides = array<i32>} : memref<2x8x32xf32, #tpu.memory_space<vmem>>, vector<2x8x32xf32>,
    } else {
    }
    %c0 = arith.constant 0 : index
    %c0_4 = arith.constant 0 : index
    %c0_5 = arith.constant 0 : index
    %c0_6 = arith.constant 0 : index
    %8 = vector.load %arg3[%c0, %c0_4, %c0_5, %c0_6] : memref<1x2x8x32xbf16, #tpu.memory_space<vmem>>, vector<1x2x8x32xbf16>
    %9 = vector.shape_cast %8 : vector<1x2x8x32xbf16> to vector<2x8x32xbf16>
    %c0_7 = arith.constant 0 : index
    %c0_8 = arith.constant 0 : index
    %c0_9 = arith.constant 0 : index
    %c0_10 = arith.constant 0 : index
    %10 = vector.load %arg4[%c0_7, %c0_8, %c0_9, %c0_10] : memref<1x2x8x32xbf16, #tpu.memory_space<vmem>>, vector<1x2x8x32xbf16>
    %11 = vector.shape_cast %10 : vector<1x2x8x32xbf16> to vector<2x8x32xbf16>
    %c0_11 = arith.constant 0 : index
    %c0_12 = arith.constant 0 : index
    %c0_13 = arith.constant 0 : index
    %c0_14 = arith.constant 0 : index
    %12 = vector.load %arg5[%c0_11, %c0_12, %c0_13, %c0_14] : memref<1x2x8x32xbf16, #tpu.memory_space<vmem>>, vector<1x2x8x32xbf16>
    %13 = vector.shape_cast %12 : vector<1x2x8x32xbf16> to vector<2x8x32xbf16>
    "tpu.trace_start"() <{level = 10 : i32, message = "bqd,bkd->bqk"}> : () -> ()
    %cst = arith.constant dense<0.000000e+00> : vector<2x8x8xf32>
    %14 = tpu.matmul %9, %11, %cst {dimension_numbers = #tpu.dot_dimension_numbers<[2], [2], [1], [1], [0, 0, 0, 1, 1, 1], [0], [0]>} : vector<2x8x32xbf16>, vector<2x8x32xbf16>, vector<2x8x8xf32> -> vector<2x8x8xf32>
    "tpu.trace_stop"() : () -> ()
    %c0_15 = arith.constant 0 : index
    %c0_16 = arith.constant 0 : index
    %c0_17 = arith.constant 0 : index
    %15 = vector.load %arg11[%c0_15, %c0_16, %c0_17] : memref<2x8x1xf32, #tpu.memory_space<vmem>>, vector<2x8x1xf32>
    %cst_18 = arith.constant dense<0xFF800000> : vector<2x8xf32>
    %16 = vector.multi_reduction <maximumf>, %14, %cst_18 [2] : vector<2x8x8xf32> to vector<2x8xf32>
    %17 = vector.shape_cast %16 : vector<2x8xf32> to vector<2x8x1xf32>
    %18 = arith.maximumf %15, %17 : vector<2x8x1xf32>
    %c0_19 = arith.constant 0 : index
    %c0_20 = arith.constant 0 : index
    %c0_21 = arith.constant 0 : index
    %19 = vector.load %arg11[%c0_19, %c0_20, %c0_21] : memref<2x8x1xf32, #tpu.memory_space<vmem>>, vector<2x8x1xf32>
    %20 = arith.subf %19, %18 : vector<2x8x1xf32>
    %21 = math.exp %20 : vector<2x8x1xf32>
    %22 = vector.broadcast %18 : vector<2x8x1xf32> to vector<2x8x8xf32>
    %23 = arith.subf %14, %22 : vector<2x8x8xf32>
    %24 = math.exp %23 : vector<2x8x8xf32>
    %c0_22 = arith.constant 0 : index
    %c0_23 = arith.constant 0 : index
    %c0_24 = arith.constant 0 : index
    %25 = vector.load %arg12[%c0_22, %c0_23, %c0_24] : memref<2x8x1xf32, #tpu.memory_space<vmem>>, vector<2x8x1xf32>
    %26 = arith.mulf %21, %25 : vector<2x8x1xf32>
    %cst_25 = arith.constant dense<0.000000e+00> : vector<2x8xf32>
    %27 = vector.multi_reduction <add>, %24, %cst_25 [2] : vector<2x8x8xf32> to vector<2x8xf32>
    %28 = vector.shape_cast %27 : vector<2x8xf32> to vector<2x8x1xf32>
    %29 = arith.addf %26, %28 : vector<2x8x1xf32>
    %c0_26 = arith.constant 0 : index
    %c0_27 = arith.constant 0 : index
    %c0_28 = arith.constant 0 : index
    %30 = vector.load %arg12[%c0_26, %c0_27, %c0_28] : memref<2x8x1xf32, #tpu.memory_space<vmem>>, vector<2x8x1xf32>
    tpu.vector_store %arg12[%c0_26, %c0_27, %c0_28], %29 {strides = array<i32>} : memref<2x8x1xf32, #tpu.memory_space<vmem>>, vector<2x8x1xf32>,
    %c0_29 = arith.constant 0 : index
    %c0_30 = arith.constant 0 : index
    %c0_31 = arith.constant 0 : index
    %31 = vector.load %arg13[%c0_29, %c0_30, %c0_31] : memref<2x8x32xf32, #tpu.memory_space<vmem>>, vector<2x8x32xf32>
    %32 = vector.broadcast %21 : vector<2x8x1xf32> to vector<2x8x32xf32>
    %33 = arith.mulf %32, %31 : vector<2x8x32xf32>
    %34 = arith.truncf %24 : vector<2x8x8xf32> to vector<2x8x8xbf16>
    "tpu.trace_start"() <{level = 10 : i32, message = "bqk,bkd->bqd"}> : () -> ()
    %cst_32 = arith.constant dense<0.000000e+00> : vector<2x8x32xf32>
    %35 = tpu.matmul %34, %13, %cst_32 {dimension_numbers = #tpu.dot_dimension_numbers<[2], [1], [1], [2], [0, 0, 0, 1, 1, 2], [0], [0]>} : vector<2x8x8xbf16>, vector<2x8x32xbf16>, vector<2x8x32xf32> -> vector<2x8x32xf32>
    "tpu.trace_stop"() : () -> ()
    %36 = arith.addf %33, %35 : vector<2x8x32xf32>
    %c0_33 = arith.constant 0 : index
    %c0_34 = arith.constant 0 : index
    %c0_35 = arith.constant 0 : index
    %37 = vector.load %arg13[%c0_33, %c0_34, %c0_35] : memref<2x8x32xf32, #tpu.memory_space<vmem>>, vector<2x8x32xf32>
    tpu.vector_store %arg13[%c0_33, %c0_34, %c0_35], %36 {strides = array<i32>} : memref<2x8x32xf32, #tpu.memory_space<vmem>>, vector<2x8x32xf32>,
    %c0_36 = arith.constant 0 : index
    %c0_37 = arith.constant 0 : index
    %c0_38 = arith.constant 0 : index
    %38 = vector.load %arg11[%c0_36, %c0_37, %c0_38] : memref<2x8x1xf32, #tpu.memory_space<vmem>>, vector<2x8x1xf32>
    tpu.vector_store %arg11[%c0_36, %c0_37, %c0_38], %18 {strides = array<i32>} : memref<2x8x1xf32, #tpu.memory_space<vmem>>, vector<2x8x1xf32>,
    %c0_i32_39 = arith.constant 0 : i32
    %39 = arith.cmpi eq, %arg2, %c0_i32_39 : i32
    %40 = arith.extui %39 : i1 to i32
    %c0_i32_40 = arith.constant 0 : i32
    %41 = arith.cmpi ne, %40, %c0_i32_40 : i32
    scf.if %41 {
      %c0_43 = arith.constant 0 : index
      %c0_44 = arith.constant 0 : index
      %c0_45 = arith.constant 0 : index
      %47 = vector.load %arg14[%c0_43, %c0_44, %c0_45] : memref<2x8x32xf32, #tpu.memory_space<vmem>>, vector<2x8x32xf32>
      %c0_46 = arith.constant 0 : index
      %c0_47 = arith.constant 0 : index
      %c0_48 = arith.constant 0 : index
      %48 = vector.load %arg13[%c0_46, %c0_47, %c0_48] : memref<2x8x32xf32, #tpu.memory_space<vmem>>, vector<2x8x32xf32>
      %c0_49 = arith.constant 0 : index
      %c0_50 = arith.constant 0 : index
      %c0_51 = arith.constant 0 : index
      %49 = vector.load %arg12[%c0_49, %c0_50, %c0_51] : memref<2x8x1xf32, #tpu.memory_space<vmem>>, vector<2x8x1xf32>
      %50 = tpu.reciprocal %49 {approx = true} : vector<2x8x1xf32> -> vector<2x8x1xf32>
      %51 = vector.broadcast %50 : vector<2x8x1xf32> to vector<2x8x32xf32>
      %52 = arith.mulf %48, %51 : vector<2x8x32xf32>
      %53 = arith.addf %47, %52 : vector<2x8x32xf32>
      %c0_52 = arith.constant 0 : index
      %c0_53 = arith.constant 0 : index
      %c0_54 = arith.constant 0 : index
      %54 = vector.load %arg14[%c0_52, %c0_53, %c0_54] : memref<2x8x32xf32, #tpu.memory_space<vmem>>, vector<2x8x32xf32>
      tpu.vector_store %arg14[%c0_52, %c0_53, %c0_54], %53 {strides = array<i32>} : memref<2x8x32xf32, #tpu.memory_space<vmem>>, vector<2x8x32xf32>,
    } else {
    }
    %c3_i32 = arith.constant 3 : i32
    %42 = arith.cmpi eq, %arg1, %c3_i32 : i32
    %c0_i32_41 = arith.constant 0 : i32
    %43 = arith.cmpi eq, %arg2, %c0_i32_41 : i32
    %44 = arith.andi %42, %43 : i1
    %45 = arith.extui %44 : i1 to i32
    %c0_i32_42 = arith.constant 0 : i32
    %46 = arith.cmpi ne, %45, %c0_i32_42 : i32
    scf.if %46 {
      %c0_43 = arith.constant 0 : index
      %c0_44 = arith.constant 0 : index
      %c0_45 = arith.constant 0 : index
      %47 = vector.load %arg14[%c0_43, %c0_44, %c0_45] : memref<2x8x32xf32, #tpu.memory_space<vmem>>, vector<2x8x32xf32>
      %48 = vector.shape_cast %47 : vector<2x8x32xf32> to vector<16x32xf32>
      %49 = arith.truncf %48 : vector<16x32xf32> to vector<16x32xbf16>
      %c0_46 = arith.constant 0 : index
      %c0_47 = arith.constant 0 : index
      %50 = vector.load %arg6[%c0_46, %c0_47] : memref<32x64xbf16, #tpu.memory_space<vmem>>, vector<32x64xbf16>
      %cst_48 = arith.constant dense<0.000000e+00> : vector<16x64xf32>
      %51 = tpu.matmul %49, %50, %cst_48 {dimension_numbers = #tpu.dot_dimension_numbers<[1], [0], [0], [1], [0, 0, 1, 1], [], []>} : vector<16x32xbf16>, vector<32x64xbf16>, vector<16x64xf32> -> vector<16x64xf32>
      %c0_49 = arith.constant 0 : index
      %c0_50 = arith.constant 0 : index
      %52 = vector.load %arg7[%c0_49, %c0_50] : memref<1x64xf32, #tpu.memory_space<vmem>>, vector<1x64xf32>
      %53 = vector.broadcast %52 : vector<1x64xf32> to vector<16x64xf32>
      %54 = arith.addf %51, %53 : vector<16x64xf32>
      %cst_51 = arith.constant 0.000000e+00 : f32
      %55 = vector.broadcast %cst_51 : f32 to vector<16x64xf32>
      %56 = arith.maximumf %54, %55 : vector<16x64xf32>
      %57 = arith.truncf %56 : vector<16x64xf32> to vector<16x64xbf16>
      %c0_52 = arith.constant 0 : index
      %c0_53 = arith.constant 0 : index
      %58 = vector.load %arg8[%c0_52, %c0_53] : memref<64x32xbf16, #tpu.memory_space<vmem>>, vector<64x32xbf16>
      %cst_54 = arith.constant dense<0.000000e+00> : vector<16x32xf32>
      %59 = tpu.matmul %57, %58, %cst_54 {dimension_numbers = #tpu.dot_dimension_numbers<[1], [0], [0], [1], [0, 0, 1, 1], [], []>} : vector<16x64xbf16>, vector<64x32xbf16>, vector<16x32xf32> -> vector<16x32xf32>
      %c0_55 = arith.constant 0 : index
      %c0_56 = arith.constant 0 : index
      %60 = vector.load %arg9[%c0_55, %c0_56] : memref<1x32xf32, #tpu.memory_space<vmem>>, vector<1x32xf32>
      %61 = vector.broadcast %60 : vector<1x32xf32> to vector<16x32xf32>
      %62 = arith.addf %59, %61 : vector<16x32xf32>
      %63 = vector.shape_cast %62 : vector<16x32xf32> to vector<2x8x32xf32>
      %64 = arith.truncf %63 : vector<2x8x32xf32> to vector<2x8x32xbf16>
      %c0_57 = arith.constant 0 : index
      %c0_58 = arith.constant 0 : index
      %c0_59 = arith.constant 0 : index
      %65 = vector.load %arg10[%c0_57, %c0_58, %c0_59] : memref<2x8x32xbf16, #tpu.memory_space<vmem>>, vector<2x8x32xbf16>
      tpu.vector_store %arg10[%c0_57, %c0_58, %c0_59], %64 {strides = array<i32>} : memref<2x8x32xbf16, #tpu.memory_space<vmem>>, vector<2x8x32xbf16>,
    } else {
    }
    return
  }
  func.func @transform_0(%arg0: i32, %arg1: i32, %arg2: i32) -> (i32, i32, i32, i32) {
    %c0_i32 = arith.constant 0 : i32
    %c0_i32_0 = arith.constant 0 : i32
    %c0_i32_1 = arith.constant 0 : i32
    return %arg1, %c0_i32, %arg0, %c0_i32_0 : i32, i32, i32, i32
  }
  func.func @transform_1(%arg0: i32, %arg1: i32, %arg2: i32) -> (i32, i32, i32, i32) {
    %c0_i32 = arith.constant 0 : i32
    %c0_i32_0 = arith.constant 0 : i32
    %c0_i32_1 = arith.constant 0 : i32
    return %arg1, %c0_i32, %arg2, %c0_i32_0 : i32, i32, i32, i32
  }
  func.func @transform_2(%arg0: i32, %arg1: i32, %arg2: i32) -> (i32, i32, i32, i32) {
    %c0_i32 = arith.constant 0 : i32
    %c0_i32_0 = arith.constant 0 : i32
    %c0_i32_1 = arith.constant 0 : i32
    return %arg1, %c0_i32, %arg2, %c0_i32_0 : i32, i32, i32, i32
  }
  func.func @transform_3(%arg0: i32, %arg1: i32, %arg2: i32) -> (i32, i32) {
    %c0_i32 = arith.constant 0 : i32
    %c0_i32_0 = arith.constant 0 : i32
    %c0_i32_1 = arith.constant 0 : i32
    return %c0_i32, %c0_i32_0 : i32, i32
  }
  func.func @transform_4(%arg0: i32, %arg1: i32, %arg2: i32) -> (i32, i32) {
    %c0_i32 = arith.constant 0 : i32
    %c0_i32_0 = arith.constant 0 : i32
    %c0_i32_1 = arith.constant 0 : i32
    return %c0_i32, %c0_i32_0 : i32, i32
  }
  func.func @transform_5(%arg0: i32, %arg1: i32, %arg2: i32) -> (i32, i32) {
    %c0_i32 = arith.constant 0 : i32
    %c0_i32_0 = arith.constant 0 : i32
    %c0_i32_1 = arith.constant 0 : i32
    return %c0_i32, %c0_i32_0 : i32, i32
  }
  func.func @transform_6(%arg0: i32, %arg1: i32, %arg2: i32) -> (i32, i32) {
    %c0_i32 = arith.constant 0 : i32
    %c0_i32_0 = arith.constant 0 : i32
    %c0_i32_1 = arith.constant 0 : i32
    return %c0_i32, %c0_i32_0 : i32, i32
  }
  func.func @transform_7(%arg0: i32, %arg1: i32, %arg2: i32) -> (i32, i32, i32) {
    %c0_i32 = arith.constant 0 : i32
    %c0_i32_0 = arith.constant 0 : i32
    %c0_i32_1 = arith.constant 0 : i32
    return %c0_i32, %arg0, %c0_i32_0 : i32, i32, i32
  }
}

</mosaic_0001>

<llo_original>
// kernel: bert_forward.2
$region0: #{bert_forward.2}
  #allocation0 [shape = 'u32[]', space=smem, size = 0x4, offset = 0x4, fixed_abs, tag = 'smem constant byte address 0x4 - core index']
  #allocation1 [shape = 'u32[144,128]{1,0:T(1,128)}', space=vmem, size = 0x12000, scoped, tag = 'internal scratch']
  %s0 = inlined_call_operand.hbm [shape: bf16[16,32], index: 0, kind: input, shape index: {}]
  %s1 = inlined_call_operand.hbm [shape: bf16[4,32,96], index: 1, kind: input, shape index: {}]
  %s2 = inlined_call_operand.hbm [shape: f32[4,1,96], index: 2, kind: input, shape index: {}]
  %s3 = inlined_call_operand.hbm [shape: bf16[4,16,32], index: 3, kind: output, shape index: {0}]
  %s4 = inlined_call_operand.hbm [shape: bf16[4,16,32], index: 4, kind: output, shape index: {1}]
  %s5 = inlined_call_operand.hbm [shape: bf16[4,16,32], index: 5, kind: output, shape index: {2}]
  %6 = xla_tuple %s3, %s4, %s5
  %s7 = sld [smem:[#allocation0]]
  $region73: #{bert_forward.2} parent=0
    _
  %s9 = ssub.s32 1, %s7
  %s10 = scalar_select 0, %s9, %s7
  $region1: #{bert_forward.2} parent=0
    #allocation2 [shape = 'u8[4096]{0}', space=vmem, size = 0x1000, scoped, tag = 'input window, operand 0, single buffered']
    #allocation3 [shape = 's32[2]{0}', space=sflag, size = 0x8, scoped, tag = 'scoped memory for bert_forward.2']
    #allocation4 [shape = 's32[2]{0}', space=sflag, size = 0x8, scoped, tag = 'scoped memory for bert_forward.2']
    #allocation5 [shape = 'u8[16384]{0}', space=vmem, size = 0x4000, scoped, tag = 'input window, operand 1']
    #allocation6 [shape = 's32[2]{0}', space=sflag, size = 0x8, scoped, tag = 'scoped memory for bert_forward.2']
    #allocation7 [shape = 'u8[1024]{0}', space=vmem, size = 0x400, scoped, tag = 'input window, operand 2']
    #allocation8 [shape = 'u8[8192]{0}', space=vmem, size = 0x2000, scoped, tag = 'output window, operand 0']
    #allocation9 [shape = 'u8[8192]{0}', space=vmem, size = 0x2000, scoped, tag = 'output window, operand 1']
    #allocation10 [shape = 's32[2]{0}', space=sflag, size = 0x8, scoped, tag = 'scoped memory for bert_forward.2']
    #allocation11 [shape = 'u8[8192]{0}', space=vmem, size = 0x2000, scoped, tag = 'output window, operand 2']
    %11 = vsyncpa [#allocation3], 0
    %12 = vsyncpa [#allocation6], 0
    %s13 = scalar_lea.sflag [#allocation6], 1
    %14 = vsyncpa %s13, 0
    %15 = vsyncpa [#allocation4], 0
    %s16 = scalar_lea.sflag [#allocation4], 1
    %17 = vsyncpa %s16, 0
    %18 = vsyncpa [#allocation10], 0
    %s19 = scalar_lea.sflag [#allocation10], 1
    %20 = vsyncpa %s19, 0
    loop: start=0, step=1, limit=6
    $region2: #{bert_forward.2} parent=1 // loop_pre_header
      _
    $region3: #{bert_forward.2} parent=1 // loop_header
      %s22 = sphi 0, %s26
      %p23 = scmp.ge.s32.totalorder %s22, 6
      %s29 = sphi 0, %s41
      %s30 = sphi 0, %s37
      %s31 = sphi 0, %s29
      %s32 = sphi 0, %s30
      %s33 = sphi 0, %s31
      %s34 = sphi 0, %s32
      %s44 = sphi 0, %s46
      %s47 = sphi 0, %s44
      %s48 = sphi 0, %s47
      %s64 = sphi 0, %s48
      %s70 = sphi 0, %s72
      %s73 = sphi 0, %s70
      %s74 = sphi 0, %s73
      %s90 = sphi 0, %s74
      %s96 = sphi 0, %s98
      %s99 = sphi 0, %s96
      %s100 = sphi 0, %s99
      %s116 = sphi 0, %s100
      %s124 = sphi 0, %s126
      %s127 = sphi 0, %s124
      %s128 = sphi 0, %s127
      %s144 = sphi 0, %s128
      %s152 = sphi 0, %s154
      %s155 = sphi 0, %s152
      %s156 = sphi 0, %s155
      %s172 = sphi 0, %s156
      %s180 = sphi 0, %s182
      %s183 = sphi 0, %s180
      %s184 = sphi 0, %s183
      %s200 = sphi 0, %s184
    $region4: #{bert_forward.2} parent=1 // loop_header_branch
      %25 = sbr.rel (%p23) target = $region8
    $region5: #{bert_forward.2} parent=1 // loop_body
      %s27 = ssub.s32 %s22, 1
      %s28 = ssub.s32 %s22, 2
      %s35 = sadd.s32 1, %s30
      %p36 = scmp.ge.s32.totalorder %s35, 1
      %s37 = scalar_select %p36, 0, %s35
      %s38 = sadd.s32 1, %s29
      %s39 = scalar_select %p36, %s38, %s29
      %p40 = scmp.ge.s32.totalorder %s39, 4
      %s41 = scalar_select %p40, 0, %s39
      %s42 = ssub.s32 %s30, %s37
      %p43 = scmp.eq.s32.totalorder %s42, 0
      %s45 = sadd.s32 %s44, 1
      %s46 = scalar_select %p43, %s44, %s45
      %p49 = pneg %p43
      %p50 = scmp.eq.s32.totalorder %s22, 3
      %p51 = por %p49, %p50
      %p52 = scmp.ne.s32.totalorder %s44, %s47
      %p53 = scmp.eq.s32.totalorder %s22, 0
      %p54 = por %p52, %p53
      %p55 = scmp.ne.s32.totalorder %s44, %s47
      %p56 = scmp.eq.s32.totalorder %s27, 3
      %p57 = por %p55, %p56
      %p58 = scmp.ne.s32.totalorder %s47, %s48
      %p59 = scmp.eq.s32.totalorder %s27, 0
      %p60 = por %p58, %p59
      %p61 = scmp.ne.s32.totalorder %s47, %s48
      %p62 = scmp.eq.s32.totalorder %s28, 3
      %p63 = por %p61, %p62
      %p65 = scmp.ne.s32.totalorder %s48, %s64
      %p66 = scmp.eq.s32.totalorder %s28, 0
      %p67 = por %p65, %p66
      %s68 = ssub.s32 %s29, %s41
      %p69 = scmp.eq.s32.totalorder %s68, 0
      %s71 = sadd.s32 %s70, 1
      %s72 = scalar_select %p69, %s70, %s71
      %p75 = pneg %p69
      %p76 = scmp.eq.s32.totalorder %s22, 3
      %p77 = por %p75, %p76
      %p78 = scmp.ne.s32.totalorder %s70, %s73
      %p79 = scmp.eq.s32.totalorder %s22, 0
      %p80 = por %p78, %p79
      %p81 = scmp.ne.s32.totalorder %s70, %s73
      %p82 = scmp.eq.s32.totalorder %s27, 3
      %p83 = por %p81, %p82
      %p84 = scmp.ne.s32.totalorder %s73, %s74
      %p85 = scmp.eq.s32.totalorder %s27, 0
      %p86 = por %p84, %p85
      %p87 = scmp.ne.s32.totalorder %s73, %s74
      %p88 = scmp.eq.s32.totalorder %s28, 3
      %p89 = por %p87, %p88
      %p91 = scmp.ne.s32.totalorder %s74, %s90
      %p92 = scmp.eq.s32.totalorder %s28, 0
      %p93 = por %p91, %p92
      %s94 = ssub.s32 %s29, %s41
      %p95 = scmp.eq.s32.totalorder %s94, 0
      %s97 = sadd.s32 %s96, 1
      %s98 = scalar_select %p95, %s96, %s97
      %p101 = pneg %p95
      %p102 = scmp.eq.s32.totalorder %s22, 3
      %p103 = por %p101, %p102
      %p104 = scmp.ne.s32.totalorder %s96, %s99
      %p105 = scmp.eq.s32.totalorder %s22, 0
      %p106 = por %p104, %p105
      %p107 = scmp.ne.s32.totalorder %s96, %s99
      %p108 = scmp.eq.s32.totalorder %s27, 3
      %p109 = por %p107, %p108
      %p110 = scmp.ne.s32.totalorder %s99, %s100
      %p111 = scmp.eq.s32.totalorder %s27, 0
      %p112 = por %p110, %p111
      %p113 = scmp.ne.s32.totalorder %s99, %s100
      %p114 = scmp.eq.s32.totalorder %s28, 3
      %p115 = por %p113, %p114
      %p117 = scmp.ne.s32.totalorder %s100, %s116
      %p118 = scmp.eq.s32.totalorder %s28, 0
      %p119 = por %p117, %p118
      %s120 = ssub.s32 %s29, %s41
      %s121 = ssub.s32 %s30, %s37
      %s122 = sor.u32 %s120, %s121
      %p123 = scmp.eq.s32.totalorder %s122, 0
      %s125 = sadd.s32 %s124, 1
      %s126 = scalar_select %p123, %s124, %s125
      %p129 = pneg %p123
      %p130 = scmp.eq.s32.totalorder %s22, 3
      %p131 = por %p129, %p130
      %p132 = scmp.ne.s32.totalorder %s124, %s127
      %p133 = scmp.eq.s32.totalorder %s22, 0
      %p134 = por %p132, %p133
      %p135 = scmp.ne.s32.totalorder %s124, %s127
      %p136 = scmp.eq.s32.totalorder %s27, 3
      %p137 = por %p135, %p136
      %p138 = scmp.ne.s32.totalorder %s127, %s128
      %p139 = scmp.eq.s32.totalorder %s27, 0
      %p140 = por %p138, %p139
      %p141 = scmp.ne.s32.totalorder %s127, %s128
      %p142 = scmp.eq.s32.totalorder %s28, 3
      %p143 = por %p141, %p142
      %p145 = scmp.ne.s32.totalorder %s128, %s144
      %p146 = scmp.eq.s32.totalorder %s28, 0
      %p147 = por %p145, %p146
      %s148 = ssub.s32 %s29, %s41
      %s149 = ssub.s32 %s30, %s37
      %s150 = sor.u32 %s148, %s149
      %p151 = scmp.eq.s32.totalorder %s150, 0
      %s153 = sadd.s32 %s152, 1
      %s154 = scalar_select %p151, %s152, %s153
      %p157 = pneg %p151
      %p158 = scmp.eq.s32.totalorder %s22, 3
      %p159 = por %p157, %p158
      %p160 = scmp.ne.s32.totalorder %s152, %s155
      %p161 = scmp.eq.s32.totalorder %s22, 0
      %p162 = por %p160, %p161
      %p163 = scmp.ne.s32.totalorder %s152, %s155
      %p164 = scmp.eq.s32.totalorder %s27, 3
      %p165 = por %p163, %p164
      %p166 = scmp.ne.s32.totalorder %s155, %s156
      %p167 = scmp.eq.s32.totalorder %s27, 0
      %p168 = por %p166, %p167
      %p169 = scmp.ne.s32.totalorder %s155, %s156
      %p170 = scmp.eq.s32.totalorder %s28, 3
      %p171 = por %p169, %p170
      %p173 = scmp.ne.s32.totalorder %s156, %s172
      %p174 = scmp.eq.s32.totalorder %s28, 0
      %p175 = por %p173, %p174
      %s176 = ssub.s32 %s29, %s41
      %s177 = ssub.s32 %s30, %s37
      %s178 = sor.u32 %s176, %s177
      %p179 = scmp.eq.s32.totalorder %s178, 0
      %s181 = sadd.s32 %s180, 1
      %s182 = scalar_select %p179, %s180, %s181
      %p185 = pneg %p179
      %p186 = scmp.eq.s32.totalorder %s22, 3
      %p187 = por %p185, %p186
      %p188 = scmp.ne.s32.totalorder %s180, %s183
      %p189 = scmp.eq.s32.totalorder %s22, 0
      %p190 = por %p188, %p189
      %p191 = scmp.ne.s32.totalorder %s180, %s183
      %p192 = scmp.eq.s32.totalorder %s27, 3
      %p193 = por %p191, %p192
      %p194 = scmp.ne.s32.totalorder %s183, %s184
      %p195 = scmp.eq.s32.totalorder %s27, 0
      %p196 = por %p194, %p195
      %p197 = scmp.ne.s32.totalorder %s183, %s184
      %p198 = scmp.eq.s32.totalorder %s28, 3
      %p199 = por %p197, %p198
      %p201 = scmp.ne.s32.totalorder %s184, %s200
      %p202 = scmp.eq.s32.totalorder %s28, 0
      %p203 = por %p201, %p202
      %p204 = scmp.le.s32.totalorder 1, %s22
      %p205 = scmp.lt.s32.totalorder %s22, 5
      %p206 = pnand %p204, %p205
      %p207 = pneg %p206
      // Predicated region
      $region9: #{bert_forward.2} parent=5 // pred_check
        _
      $region10: #{bert_forward.2} parent=5 // pred_check_branch
        %209 = sbr.rel (%p206) target = $region12
      $region11: #{bert_forward.2} parent=5 // pred_region
        %s210 = ssub.s32 %s22, 1
        // Predicated region
        $region13: #{bert_forward.2} parent=11 // pred_check
          %p211 = pneg %p60
        $region14: #{bert_forward.2} parent=11 // pred_check_branch
          %213 = sbr.rel (%p211) target = $region16
        $region15: #{bert_forward.2} parent=11 // pred_region
          %s214 = smul.u32 2, %s32
          %s216 = ssub.s32 128, 128
          %217 = vsyncadd [#allocation3], %s216
          %s218 = smul.addr %s214, 64
          %s219 = scalar_lea.hbm %s0, %s218
          %s220 = sshll.u32 [#allocation2], 4
          %s221 = int_to_ptr.vmem [resolvable:$true] %s220
          %226 = dma.hbm_to_vmem [thread:$0]  %s219, 128, %s221, [#allocation3], 64, 64, 4
        $region16: #{bert_forward.2} parent=11 // pred_fallthru
          _
      $region12: #{bert_forward.2} parent=5 // pred_fallthru
        _
      %p227 = scmp.lt.s32.totalorder %s22, 4
      // Predicated region
      $region17: #{bert_forward.2} parent=5 // pred_check
        %p228 = pneg %p227
      $region18: #{bert_forward.2} parent=5 // pred_check_branch
        %230 = sbr.rel (%p228) target = $region20
      $region19: #{bert_forward.2} parent=5 // pred_region
        // Predicated region
        $region21: #{bert_forward.2} parent=19 // pred_check
          %p231 = pneg %p80
        $region22: #{bert_forward.2} parent=19 // pred_check_branch
          %233 = sbr.rel (%p231) target = $region24
        $region23: #{bert_forward.2} parent=19 // pred_region
          %s234 = sand.u32 %s22, 1
          %s235 = scalar_lea.sflag [#allocation6], %s234
          %s236 = sand.u32 %s70, 1
          %s237 = smul.addr %s236, 16
          %s238 = scalar_lea.vmem [#allocation5], %s237
          %s240 = ssub.s32 256, 256
          %241 = vsyncadd %s235, %s240
          %s242 = smul.addr %s29, 4
          %s243 = smul.addr %s242, 64
          %s244 = scalar_lea.hbm %s1, %s243
          %s245 = sshll.u32 %s238, 4
          %s246 = int_to_ptr.vmem [resolvable:$true] %s245
          %251 = dma.hbm_to_vmem [thread:$0]  %s244, 256, %s246, %s235, 64, 64, 4
        $region24: #{bert_forward.2} parent=19 // pred_fallthru
          _
        // Predicated region
        $region25: #{bert_forward.2} parent=19 // pred_check
          %p252 = pneg %p106
        $region26: #{bert_forward.2} parent=19 // pred_check_branch
          %254 = sbr.rel (%p252) target = $region28
        $region27: #{bert_forward.2} parent=19 // pred_region
          %s255 = sand.u32 %s22, 1
          %s256 = scalar_lea.sflag [#allocation6], %s255
          %s257 = sand.u32 %s96, 1
          %s258 = scalar_lea.vmem [#allocation7], %s257
          %s260 = ssub.s32 16, 16
          %261 = vsyncadd %s256, %s260
          %s262 = smul.addr %s29, 16
          %s263 = scalar_lea.hbm %s2, %s262
          %s265 = sshll.u32 %s258, 4
          %s266 = int_to_ptr.vmem [resolvable:$true] %s265
          %268 = dma.hbm_to_vmem [thread:$0]  %s263, 16, %s266, %s256
        $region28: #{bert_forward.2} parent=19 // pred_fallthru
          _
      $region20: #{bert_forward.2} parent=5 // pred_fallthru
        _
      %p269 = scmp.le.s32.totalorder 1, %s22
      %p270 = scmp.lt.s32.totalorder %s22, 5
      %p271 = pnand %p269, %p270
      %p272 = pneg %p271
      // Predicated region
      $region29: #{bert_forward.2} parent=5 // pred_check
        _
      $region30: #{bert_forward.2} parent=5 // pred_check_branch
        %274 = sbr.rel (%p271) target = $region32
      $region31: #{bert_forward.2} parent=5 // pred_region
        %s275 = ssub.s32 %s22, 1
        // Predicated region
        $region33: #{bert_forward.2} parent=31 // pred_check
          %p276 = pneg %p60
        $region34: #{bert_forward.2} parent=31 // pred_check_branch
          %278 = sbr.rel (%p276) target = $region36
        $region35: #{bert_forward.2} parent=31 // pred_region
          %279 = dma.done [#allocation3], 128
        $region36: #{bert_forward.2} parent=31 // pred_fallthru
          _
        %s280 = sand.u32 %s27, 1
        %s281 = scalar_lea.sflag [#allocation6], %s280
        %s282 = sand.u32 %s73, 1
        %s283 = smul.addr %s282, 16
        %s284 = scalar_lea.vmem [#allocation5], %s283
        // Predicated region
        $region37: #{bert_forward.2} parent=31 // pred_check
          %p285 = pneg %p86
        $region38: #{bert_forward.2} parent=31 // pred_check_branch
          %287 = sbr.rel (%p285) target = $region40
        $region39: #{bert_forward.2} parent=31 // pred_region
          %288 = dma.done %s281, 256
        $region40: #{bert_forward.2} parent=31 // pred_fallthru
          _
        %s289 = sand.u32 %s27, 1
        %s290 = scalar_lea.sflag [#allocation6], %s289
        %s291 = sand.u32 %s99, 1
        %s292 = scalar_lea.vmem [#allocation7], %s291
        // Predicated region
        $region41: #{bert_forward.2} parent=31 // pred_check
          %p293 = pneg %p112
        $region42: #{bert_forward.2} parent=31 // pred_check_branch
          %295 = sbr.rel (%p293) target = $region44
        $region43: #{bert_forward.2} parent=31 // pred_region
          %296 = dma.done %s290, 16
        $region44: #{bert_forward.2} parent=31 // pred_fallthru
          _
        %p297 = pneg %p60
        %p298 = pneg %p57
        %s299 = sand.u32 %s27, 1
        %s300 = scalar_lea.sflag [#allocation6], %s299
        %s301 = sand.u32 %s73, 1
        %s302 = smul.addr %s301, 16
        %s303 = scalar_lea.vmem [#allocation5], %s302
        %p304 = pneg %p86
        %p305 = pneg %p83
        %s306 = sand.u32 %s27, 1
        %s307 = scalar_lea.sflag [#allocation6], %s306
        %s308 = sand.u32 %s99, 1
        %s309 = scalar_lea.vmem [#allocation7], %s308
        %p310 = pneg %p112
        %p311 = pneg %p109
        %p312 = pneg %p140
        %p313 = pneg %p137
        %s314 = sand.u32 %s127, 1
        %s315 = scalar_lea.sflag [#allocation4], %s314
        %s316 = sand.u32 %s127, 1
        %s317 = smul.addr %s316, 8
        %s318 = scalar_lea.vmem [#allocation8], %s317
        %p319 = pneg %p168
        %p320 = pneg %p165
        %s321 = sand.u32 %s27, 1
        %s322 = scalar_lea.sflag [#allocation10], %s321
        %s323 = sand.u32 %s155, 1
        %s324 = smul.addr %s323, 8
        %s325 = scalar_lea.vmem [#allocation9], %s324
        %p326 = pneg %p196
        %p327 = pneg %p193
        %s328 = sand.u32 %s27, 1
        %s329 = scalar_lea.sflag [#allocation10], %s328
        %s330 = sand.u32 %s183, 1
        %s331 = smul.addr %s330, 8
        %s332 = scalar_lea.vmem [#allocation11], %s331
        %s333 = smul.u32 2, %s32
        %s334 = smul.u32 2, %s32
        %s335 = smul.u32 2, %s32
        %s336 = smul.u32 2, %s32
        %v338 = vld [vmem:[#allocation2] sm:$0xf]
        %v339 = vld [vmem:[#allocation2 + $0x4] sm:$0xf]
        %v340 = vld [vmem:[%s284] sm:$0xf]
        %v341 = vld [vmem:[%s284 + $0x4] sm:$0xf]
        %v342 = vld [vmem:[%s284 + $0x8] sm:$0xf]
        %v343 = vld [vmem:[%s284 + $0xc] sm:$0xf]
        %v344 = vld [vmem:[%s292] sm:$0x1]
        %v346 = vlaneseq
        %v347 = vshrl.u32 %v346, 7
        %v348 = vsub.s32 0, %v347
        %v349 = vrot.slane %v344, %v348
        %v353 = vunpack.c.l.b16 %v338
        %v354 = vunpack.c.l.b16 %v339
        %v355 = vpack.c.b16 %v354, %v353
        %v360 = vunpack.c.l.b16 %v340
        %v361 = vunpack.c.l.b16 %v341
        %v362 = vunpack.c.l.b16 %v342
        %v363 = vunpack.c.l.b16 %v343
        %v364 = vpack.c.b16 %v361, %v360
        %v365 = vpack.c.b16 %v363, %v362
        %vm368 = vcmask 261120
        %v370 = vsel %vm368, %v355, 0
        %372 = vmatprep.subr.bf16.mxu0 0
        %373 = vmatpush1.bf16.msra.mxu0 %v364
        %374 = vmatprep.subr.bf16.mxu0 0
        %375 = vmatpush1.bf16.msra.mxu0 %v365
        %376 = vmatprep.subr.bf16.mxu0 0
        %377 = vmatpush1.bf16.msra.mxu0 0
        %378 = vmatprep.subr.bf16.mxu0 0
        %379 = vmatpush1.bf16.msra.mxu0 0
        %380 = vmatprep.subr.bf16.mxu0 0
        %381 = vmatpush1.bf16.msra.mxu0 0
        %382 = vmatprep.subr.bf16.mxu0 0
        %383 = vmatpush1.bf16.msra.mxu0 0
        %384 = vmatprep.subr.bf16.mxu0 0
        %385 = vmatpush1.bf16.msra.mxu0 0
        %386 = vmatprep.subr.bf16.mxu0 0
        %387 = vmatpush1.bf16.msra.mxu0 0
        %388 = vmatprep.subr.bf16.mxu0 0
        %389 = vmatpush1.bf16.msra.mxu0 0
        %390 = vmatprep.subr.bf16.mxu0 0
        %391 = vmatpush1.bf16.msra.mxu0 0
        %392 = vmatprep.subr.bf16.mxu0 0
        %393 = vmatpush1.bf16.msra.mxu0 0
        %394 = vmatprep.subr.bf16.mxu0 0
        %395 = vmatpush1.bf16.msra.mxu0 0
        %396 = vmatprep.subr.bf16.mxu0 0
        %397 = vmatpush1.bf16.msra.mxu0 0
        %398 = vmatprep.subr.bf16.mxu0 0
        %399 = vmatpush1.bf16.msra.mxu0 0
        %400 = vmatprep.subr.bf16.mxu0 0
        %401 = vmatpush1.bf16.msra.mxu0 0
        %402 = vmatprep.subr.bf16.mxu0 0
        %403 = vmatpush1.bf16.msra.mxu0 0
        %404 = vmatprep.mubr.bf16.mxu0 0
        %405 = vmatmul.mubr.bf16.gmra.mrb[0].mxu0 %v370
        %v406 = vpop.f32.mrb[0].mxu0
        %v407 = vadd.f32 %v349, %v406
        %v408 = vpop.f32.mrb[0].mxu0
        %v409 = vpop.f32.mrb[0].mxu0
        %v410 = vadd.f32 %v349, %v409
        %v411 = vpop.f32.mrb[0].mxu0
        %412 = vdwg.mxu0
        %v413 = vpack.c.bf16 %v410, %v407
        %v415 = vunpack.c.l.b16 %v413
        %v416 = vunpack.c.h.b16 %v413
        %v417 = vpack.c.b16 %v415, %v415
        %v418 = vpack.c.b16 %v416, %v416
        %vm421 = vcmask 257024
        %422 = vst.msk [vmem:[%s318] sm:$0xf] %vm421, %v417
        %423 = vst.msk [vmem:[%s318 + $0x4] sm:$0xf] %vm421, %v418
        %424 = vrot.lane.b32.xlu0 %v417, 96
        %v425 = vpop.permute.xlu0 %424
        %426 = vrot.lane.b32.xlu0 %v418, 96
        %v427 = vpop.permute.xlu0 %426
        %430 = vst.msk [vmem:[%s325] sm:$0xf] %vm421, %v425
        %431 = vst.msk [vmem:[%s325 + $0x4] sm:$0xf] %vm421, %v427
        %432 = vrot.lane.b32.xlu0 %v417, 64
        %v433 = vpop.permute.xlu0 %432
        %434 = vrot.lane.b32.xlu0 %v418, 64
        %v435 = vpop.permute.xlu0 %434
        %438 = vst.msk [vmem:[%s332] sm:$0xf] %vm421, %v433
        %439 = vst.msk [vmem:[%s332 + $0x4] sm:$0xf] %vm421, %v435
        %s440 = sand.u32 %s127, 1
        %s441 = scalar_lea.sflag [#allocation4], %s440
        %s442 = sand.u32 %s127, 1
        %s443 = smul.addr %s442, 8
        %s444 = scalar_lea.vmem [#allocation8], %s443
        %s445 = sand.u32 %s27, 1
        %s446 = scalar_lea.sflag [#allocation10], %s445
        %s447 = sand.u32 %s155, 1
        %s448 = smul.addr %s447, 8
        %s449 = scalar_lea.vmem [#allocation9], %s448
        %s450 = sand.u32 %s27, 1
        %s451 = scalar_lea.sflag [#allocation10], %s450
        %s452 = sand.u32 %s183, 1
        %s453 = smul.addr %s452, 8
        %s454 = scalar_lea.vmem [#allocation11], %s453
        // Predicated region
        $region45: #{bert_forward.2} parent=31 // pred_check
          %p455 = pneg %p137
        $region46: #{bert_forward.2} parent=31 // pred_check_branch
          %457 = sbr.rel (%p455) target = $region48
        $region47: #{bert_forward.2} parent=31 // pred_region
          %s458 = smul.u32 2, %s32
          %s460 = ssub.s32 128, 128
          %461 = vsyncadd %s441, %s460
          %s462 = smul.addr %s31, 2
          %s463 = sadd.s32 %s458, %s462
          %s464 = smul.addr %s463, 64
          %s465 = scalar_lea.hbm %s3, %s464
          %s466 = sshll.u32 %s444, 4
          %s467 = int_to_ptr.vmem [resolvable:$true] %s466
          %472 = dma.vmem_to_hbm [thread:$0]  %s467, 128, %s465, %s441, 64, 64, 4
        $region48: #{bert_forward.2} parent=31 // pred_fallthru
          _
        // Predicated region
        $region49: #{bert_forward.2} parent=31 // pred_check
          %p473 = pneg %p165
        $region50: #{bert_forward.2} parent=31 // pred_check_branch
          %475 = sbr.rel (%p473) target = $region52
        $region51: #{bert_forward.2} parent=31 // pred_region
          %s476 = smul.u32 2, %s32
          %s478 = ssub.s32 128, 128
          %479 = vsyncadd %s446, %s478
          %s480 = smul.addr %s31, 2
          %s481 = sadd.s32 %s476, %s480
          %s482 = smul.addr %s481, 64
          %s483 = scalar_lea.hbm %s4, %s482
          %s484 = sshll.u32 %s449, 4
          %s485 = int_to_ptr.vmem [resolvable:$true] %s484
          %490 = dma.vmem_to_hbm [thread:$0]  %s485, 128, %s483, %s446, 64, 64, 4
        $region52: #{bert_forward.2} parent=31 // pred_fallthru
          _
        // Predicated region
        $region53: #{bert_forward.2} parent=31 // pred_check
          %p491 = pneg %p193
        $region54: #{bert_forward.2} parent=31 // pred_check_branch
          %493 = sbr.rel (%p491) target = $region56
        $region55: #{bert_forward.2} parent=31 // pred_region
          %s494 = smul.u32 2, %s32
          %s496 = ssub.s32 128, 128
          %497 = vsyncadd %s451, %s496
          %s498 = smul.addr %s31, 2
          %s499 = sadd.s32 %s494, %s498
          %s500 = smul.addr %s499, 64
          %s501 = scalar_lea.hbm %s5, %s500
          %s502 = sshll.u32 %s454, 4
          %s503 = int_to_ptr.vmem [resolvable:$true] %s502
          %508 = dma.vmem_to_hbm [thread:$0]  %s503, 128, %s501, %s451, 64, 64, 4
        $region56: #{bert_forward.2} parent=31 // pred_fallthru
          _
      $region32: #{bert_forward.2} parent=5 // pred_fallthru
        _
      %p509 = scmp.le.s32.totalorder 2, %s22
      // Predicated region
      $region57: #{bert_forward.2} parent=5 // pred_check
        %p510 = pneg %p509
      $region58: #{bert_forward.2} parent=5 // pred_check_branch
        %512 = sbr.rel (%p510) target = $region60
      $region59: #{bert_forward.2} parent=5 // pred_region
        %s513 = ssub.s32 %s22, 2
        // Predicated region
        $region61: #{bert_forward.2} parent=59 // pred_check
          %p514 = pneg %p143
        $region62: #{bert_forward.2} parent=59 // pred_check_branch
          %516 = sbr.rel (%p514) target = $region64
        $region63: #{bert_forward.2} parent=59 // pred_region
          %s517 = sand.u32 %s128, 1
          %s518 = scalar_lea.sflag [#allocation4], %s517
          %s519 = sand.u32 %s128, 1
          %s520 = smul.addr %s519, 8
          %s521 = scalar_lea.vmem [#allocation8], %s520
          %522 = dma.done %s518, 128
        $region64: #{bert_forward.2} parent=59 // pred_fallthru
          _
        // Predicated region
        $region65: #{bert_forward.2} parent=59 // pred_check
          %p523 = pneg %p171
        $region66: #{bert_forward.2} parent=59 // pred_check_branch
          %525 = sbr.rel (%p523) target = $region68
        $region67: #{bert_forward.2} parent=59 // pred_region
          %s526 = sand.u32 %s28, 1
          %s527 = scalar_lea.sflag [#allocation10], %s526
          %s528 = sand.u32 %s156, 1
          %s529 = smul.addr %s528, 8
          %s530 = scalar_lea.vmem [#allocation9], %s529
          %531 = dma.done %s527, 128
        $region68: #{bert_forward.2} parent=59 // pred_fallthru
          _
        // Predicated region
        $region69: #{bert_forward.2} parent=59 // pred_check
          %p532 = pneg %p199
        $region70: #{bert_forward.2} parent=59 // pred_check_branch
          %534 = sbr.rel (%p532) target = $region72
        $region71: #{bert_forward.2} parent=59 // pred_region
          %s535 = sand.u32 %s28, 1
          %s536 = scalar_lea.sflag [#allocation10], %s535
          %s537 = sand.u32 %s184, 1
          %s538 = smul.addr %s537, 8
          %s539 = scalar_lea.vmem [#allocation11], %s538
          %540 = dma.done %s536, 128
        $region72: #{bert_forward.2} parent=59 // pred_fallthru
          _
      $region60: #{bert_forward.2} parent=5 // pred_fallthru
        _
    $region6: #{bert_forward.2} parent=1 // loop_footer
      %s26 = sadd.s32 1, %s22
    $region7: #{bert_forward.2} parent=1 // loop_footer_branch
      %21 = sbr.rel target = $region3
    $region8: #{bert_forward.2} parent=1 // loop_exit
      _
    %541 = vsyncpa [#allocation3], 1
    %s542 = scalar_lea.sflag [#allocation3], 1
    %543 = vsyncpa %s542, 1
    %544 = vsyncpa [#allocation6], 1
    %s545 = scalar_lea.sflag [#allocation6], 1
    %546 = vsyncpa %s545, 1
    %547 = vsyncpa [#allocation4], 1
    %s548 = scalar_lea.sflag [#allocation4], 1
    %549 = vsyncpa %s548, 1
    %550 = vsyncpa [#allocation10], 1
    %s551 = scalar_lea.sflag [#allocation10], 1
    %552 = vsyncpa %s551, 1

// kernel: bert_forward.3
$region0: #{bert_forward.3}
  #allocation0 [shape = 'u32[]', space=smem, size = 0x4, offset = 0x4, fixed_abs, tag = 'smem constant byte address 0x4 - core index']
  #allocation1 [shape = 'u32[144,128]{1,0:T(1,128)}', space=vmem, size = 0x12000, scoped, tag = 'internal scratch']
  #allocation2 [shape = 'f32[2,8,1]{2,1,0:T(8,128)}', space=vmem, size = 0x2000, scoped, tag = 'scratch operand']
  #allocation3 [shape = 'f32[2,8,1]{2,1,0:T(8,128)}', space=vmem, size = 0x2000, scoped, tag = 'scratch operand']
  #allocation4 [shape = 'f32[2,8,32]{2,1,0:T(8,128)}', space=vmem, size = 0x2000, scoped, tag = 'scratch operand']
  #allocation5 [shape = 'f32[2,8,32]{2,1,0:T(8,128)}', space=vmem, size = 0x2000, scoped, tag = 'scratch operand']
  %s0 = inlined_call_operand.hbm [shape: bf16[4,2,8,32], index: 0, kind: input, shape index: {}]
  %s1 = inlined_call_operand.hbm [shape: bf16[4,2,8,32], index: 1, kind: input, shape index: {}]
  %s2 = inlined_call_operand.hbm [shape: bf16[4,2,8,32], index: 2, kind: input, shape index: {}]
  %s3 = inlined_call_operand.hbm [shape: bf16[32,64], index: 3, kind: input, shape index: {}]
  %s4 = inlined_call_operand.hbm [shape: f32[1,64], index: 4, kind: input, shape index: {}]
  %s5 = inlined_call_operand.hbm [shape: bf16[64,32], index: 5, kind: input, shape index: {}]
  %s6 = inlined_call_operand.hbm [shape: f32[1,32], index: 6, kind: input, shape index: {}]
  %s7 = inlined_call_operand.hbm [shape: bf16[2,8,32], index: 7, kind: output, shape index: {}]
  %s8 = sld [smem:[#allocation0]]
  $region105: #{bert_forward.3} parent=0
    _
  %s10 = ssub.s32 1, %s8
  %s11 = scalar_select 0, %s10, %s8
  $region1: #{bert_forward.3} parent=0
    #allocation6 [shape = 'u8[8192]{0}', space=vmem, size = 0x2000, scoped, tag = 'input window, operand 0']
    #allocation7 [shape = 's32[2]{0}', space=sflag, size = 0x8, scoped, tag = 'scoped memory for bert_forward.3']
    #allocation8 [shape = 's32[2]{0}', space=sflag, size = 0x8, scoped, tag = 'scoped memory for bert_forward.3']
    #allocation9 [shape = 'u8[8192]{0}', space=vmem, size = 0x2000, scoped, tag = 'input window, operand 1']
    #allocation10 [shape = 's32[2]{0}', space=sflag, size = 0x8, scoped, tag = 'scoped memory for bert_forward.3']
    #allocation11 [shape = 'u8[8192]{0}', space=vmem, size = 0x2000, scoped, tag = 'input window, operand 2']
    #allocation12 [shape = 'u8[8192]{0}', space=vmem, size = 0x2000, scoped, tag = 'input window, operand 3, single buffered']
    #allocation13 [shape = 's32[1]{0}', space=sflag, size = 0x4, scoped, tag = 'scoped memory for bert_forward.3']
    #allocation14 [shape = 'u8[512]{0}', space=vmem, size = 0x400, scoped, tag = 'input window, operand 4, single buffered']
    #allocation15 [shape = 'u8[16384]{0}', space=vmem, size = 0x4000, scoped, tag = 'input window, operand 5, single buffered']
    #allocation16 [shape = 's32[1]{0}', space=sflag, size = 0x4, scoped, tag = 'scoped memory for bert_forward.3']
    #allocation17 [shape = 'u8[512]{0}', space=vmem, size = 0x400, scoped, tag = 'input window, operand 6, single buffered']
    #allocation18 [shape = 'u8[4096]{0}', space=vmem, size = 0x1000, scoped, tag = 'output window, operand 0, single buffered']
    %12 = vsyncpa [#allocation7], 0
    %s13 = scalar_lea.sflag [#allocation7], 1
    %14 = vsyncpa %s13, 0
    %15 = vsyncpa [#allocation10], 0
    %s16 = scalar_lea.sflag [#allocation10], 1
    %17 = vsyncpa %s16, 0
    %18 = vsyncpa [#allocation13], 0
    %19 = vsyncpa [#allocation16], 0
    %20 = vsyncpa [#allocation8], 0
    loop: start=0, step=1, limit=6
    $region2: #{bert_forward.3} parent=1 // loop_pre_header
      _
    $region3: #{bert_forward.3} parent=1 // loop_header
      %s22 = sphi 0, %s26
      %p23 = scmp.ge.s32.totalorder %s22, 6
      %s29 = sphi 0, %s48
      %s30 = sphi 0, %s44
      %s31 = sphi 0, %s40
      %s32 = sphi 0, %s29
      %s33 = sphi 0, %s30
      %s34 = sphi 0, %s31
      %s35 = sphi 0, %s32
      %s36 = sphi 0, %s33
      %s37 = sphi 0, %s34
      %s53 = sphi 0, %s55
      %s56 = sphi 0, %s53
      %s57 = sphi 0, %s56
      %s73 = sphi 0, %s57
      %s81 = sphi 0, %s83
      %s84 = sphi 0, %s81
      %s85 = sphi 0, %s84
      %s101 = sphi 0, %s85
      %s109 = sphi 0, %s111
      %s112 = sphi 0, %s109
      %s113 = sphi 0, %s112
      %s129 = sphi 0, %s113
      %s133 = sphi 0, %s133
      %s135 = sphi 0, %s133
      %s136 = sphi 0, %s135
      %s150 = sphi 0, %s136
      %s154 = sphi 0, %s154
      %s156 = sphi 0, %s154
      %s157 = sphi 0, %s156
      %s171 = sphi 0, %s157
      %s175 = sphi 0, %s175
      %s177 = sphi 0, %s175
      %s178 = sphi 0, %s177
      %s192 = sphi 0, %s178
      %s196 = sphi 0, %s196
      %s198 = sphi 0, %s196
      %s199 = sphi 0, %s198
      %s213 = sphi 0, %s199
      %s219 = sphi 0, %s221
      %s222 = sphi 0, %s219
      %s223 = sphi 0, %s222
      %s239 = sphi 0, %s223
    $region4: #{bert_forward.3} parent=1 // loop_header_branch
      %25 = sbr.rel (%p23) target = $region8
    $region5: #{bert_forward.3} parent=1 // loop_body
      %s27 = ssub.s32 %s22, 1
      %s28 = ssub.s32 %s22, 2
      %s38 = sadd.s32 1, %s31
      %p39 = scmp.ge.s32.totalorder %s38, 1
      %s40 = scalar_select %p39, 0, %s38
      %s41 = sadd.s32 1, %s30
      %s42 = scalar_select %p39, %s41, %s30
      %p43 = scmp.ge.s32.totalorder %s42, 4
      %s44 = scalar_select %p43, 0, %s42
      %s45 = sadd.s32 1, %s29
      %s46 = scalar_select %p43, %s45, %s29
      %p47 = scmp.ge.s32.totalorder %s46, 1
      %s48 = scalar_select %p47, 0, %s46
      %s49 = ssub.s32 %s30, %s44
      %s50 = ssub.s32 %s29, %s48
      %s51 = sor.u32 %s49, %s50
      %p52 = scmp.eq.s32.totalorder %s51, 0
      %s54 = sadd.s32 %s53, 1
      %s55 = scalar_select %p52, %s53, %s54
      %p58 = pneg %p52
      %p59 = scmp.eq.s32.totalorder %s22, 3
      %p60 = por %p58, %p59
      %p61 = scmp.ne.s32.totalorder %s53, %s56
      %p62 = scmp.eq.s32.totalorder %s22, 0
      %p63 = por %p61, %p62
      %p64 = scmp.ne.s32.totalorder %s53, %s56
      %p65 = scmp.eq.s32.totalorder %s27, 3
      %p66 = por %p64, %p65
      %p67 = scmp.ne.s32.totalorder %s56, %s57
      %p68 = scmp.eq.s32.totalorder %s27, 0
      %p69 = por %p67, %p68
      %p70 = scmp.ne.s32.totalorder %s56, %s57
      %p71 = scmp.eq.s32.totalorder %s28, 3
      %p72 = por %p70, %p71
      %p74 = scmp.ne.s32.totalorder %s57, %s73
      %p75 = scmp.eq.s32.totalorder %s28, 0
      %p76 = por %p74, %p75
      %s77 = ssub.s32 %s30, %s44
      %s78 = ssub.s32 %s31, %s40
      %s79 = sor.u32 %s77, %s78
      %p80 = scmp.eq.s32.totalorder %s79, 0
      %s82 = sadd.s32 %s81, 1
      %s83 = scalar_select %p80, %s81, %s82
      %p86 = pneg %p80
      %p87 = scmp.eq.s32.totalorder %s22, 3
      %p88 = por %p86, %p87
      %p89 = scmp.ne.s32.totalorder %s81, %s84
      %p90 = scmp.eq.s32.totalorder %s22, 0
      %p91 = por %p89, %p90
      %p92 = scmp.ne.s32.totalorder %s81, %s84
      %p93 = scmp.eq.s32.totalorder %s27, 3
      %p94 = por %p92, %p93
      %p95 = scmp.ne.s32.totalorder %s84, %s85
      %p96 = scmp.eq.s32.totalorder %s27, 0
      %p97 = por %p95, %p96
      %p98 = scmp.ne.s32.totalorder %s84, %s85
      %p99 = scmp.eq.s32.totalorder %s28, 3
      %p100 = por %p98, %p99
      %p102 = scmp.ne.s32.totalorder %s85, %s101
      %p103 = scmp.eq.s32.totalorder %s28, 0
      %p104 = por %p102, %p103
      %s105 = ssub.s32 %s30, %s44
      %s106 = ssub.s32 %s31, %s40
      %s107 = sor.u32 %s105, %s106
      %p108 = scmp.eq.s32.totalorder %s107, 0
      %s110 = sadd.s32 %s109, 1
      %s111 = scalar_select %p108, %s109, %s110
      %p114 = pneg %p108
      %p115 = scmp.eq.s32.totalorder %s22, 3
      %p116 = por %p114, %p115
      %p117 = scmp.ne.s32.totalorder %s109, %s112
      %p118 = scmp.eq.s32.totalorder %s22, 0
      %p119 = por %p117, %p118
      %p120 = scmp.ne.s32.totalorder %s109, %s112
      %p121 = scmp.eq.s32.totalorder %s27, 3
      %p122 = por %p120, %p121
      %p123 = scmp.ne.s32.totalorder %s112, %s113
      %p124 = scmp.eq.s32.totalorder %s27, 0
      %p125 = por %p123, %p124
      %p126 = scmp.ne.s32.totalorder %s112, %s113
      %p127 = scmp.eq.s32.totalorder %s28, 3
      %p128 = por %p126, %p127
      %p130 = scmp.ne.s32.totalorder %s113, %s129
      %p131 = scmp.eq.s32.totalorder %s28, 0
      %p132 = por %p130, %p131
      %s134 = sadd.s32 %s133, 1
      %p137 = scmp.eq.s32.totalorder %s22, 3
      %p138 = scmp.ne.s32.totalorder %s133, %s135
      %p139 = scmp.eq.s32.totalorder %s22, 0
      %p140 = por %p138, %p139
      %p141 = scmp.ne.s32.totalorder %s133, %s135
      %p142 = scmp.eq.s32.totalorder %s27, 3
      %p143 = por %p141, %p142
      %p144 = scmp.ne.s32.totalorder %s135, %s136
      %p145 = scmp.eq.s32.totalorder %s27, 0
      %p146 = por %p144, %p145
      %p147 = scmp.ne.s32.totalorder %s135, %s136
      %p148 = scmp.eq.s32.totalorder %s28, 3
      %p149 = por %p147, %p148
      %p151 = scmp.ne.s32.totalorder %s136, %s150
      %p152 = scmp.eq.s32.totalorder %s28, 0
      %p153 = por %p151, %p152
      %s155 = sadd.s32 %s154, 1
      %p158 = scmp.eq.s32.totalorder %s22, 3
      %p159 = scmp.ne.s32.totalorder %s154, %s156
      %p160 = scmp.eq.s32.totalorder %s22, 0
      %p161 = por %p159, %p160
      %p162 = scmp.ne.s32.totalorder %s154, %s156
      %p163 = scmp.eq.s32.totalorder %s27, 3
      %p164 = por %p162, %p163
      %p165 = scmp.ne.s32.totalorder %s156, %s157
      %p166 = scmp.eq.s32.totalorder %s27, 0
      %p167 = por %p165, %p166
      %p168 = scmp.ne.s32.totalorder %s156, %s157
      %p169 = scmp.eq.s32.totalorder %s28, 3
      %p170 = por %p168, %p169
      %p172 = scmp.ne.s32.totalorder %s157, %s171
      %p173 = scmp.eq.s32.totalorder %s28, 0
      %p174 = por %p172, %p173
      %s176 = sadd.s32 %s175, 1
      %p179 = scmp.eq.s32.totalorder %s22, 3
      %p180 = scmp.ne.s32.totalorder %s175, %s177
      %p181 = scmp.eq.s32.totalorder %s22, 0
      %p182 = por %p180, %p181
      %p183 = scmp.ne.s32.totalorder %s175, %s177
      %p184 = scmp.eq.s32.totalorder %s27, 3
      %p185 = por %p183, %p184
      %p186 = scmp.ne.s32.totalorder %s177, %s178
      %p187 = scmp.eq.s32.totalorder %s27, 0
      %p188 = por %p186, %p187
      %p189 = scmp.ne.s32.totalorder %s177, %s178
      %p190 = scmp.eq.s32.totalorder %s28, 3
      %p191 = por %p189, %p190
      %p193 = scmp.ne.s32.totalorder %s178, %s192
      %p194 = scmp.eq.s32.totalorder %s28, 0
      %p195 = por %p193, %p194
      %s197 = sadd.s32 %s196, 1
      %p200 = scmp.eq.s32.totalorder %s22, 3
      %p201 = scmp.ne.s32.totalorder %s196, %s198
      %p202 = scmp.eq.s32.totalorder %s22, 0
      %p203 = por %p201, %p202
      %p204 = scmp.ne.s32.totalorder %s196, %s198
      %p205 = scmp.eq.s32.totalorder %s27, 3
      %p206 = por %p204, %p205
      %p207 = scmp.ne.s32.totalorder %s198, %s199
      %p208 = scmp.eq.s32.totalorder %s27, 0
      %p209 = por %p207, %p208
      %p210 = scmp.ne.s32.totalorder %s198, %s199
      %p211 = scmp.eq.s32.totalorder %s28, 3
      %p212 = por %p210, %p211
      %p214 = scmp.ne.s32.totalorder %s199, %s213
      %p215 = scmp.eq.s32.totalorder %s28, 0
      %p216 = por %p214, %p215
      %s217 = ssub.s32 %s29, %s48
      %p218 = scmp.eq.s32.totalorder %s217, 0
      %s220 = sadd.s32 %s219, 1
      %s221 = scalar_select %p218, %s219, %s220
      %p224 = pneg %p218
      %p225 = scmp.eq.s32.totalorder %s22, 3
      %p226 = por %p224, %p225
      %p227 = scmp.ne.s32.totalorder %s219, %s222
      %p228 = scmp.eq.s32.totalorder %s22, 0
      %p229 = por %p227, %p228
      %p230 = scmp.ne.s32.totalorder %s219, %s222
      %p231 = scmp.eq.s32.totalorder %s27, 3
      %p232 = por %p230, %p231
      %p233 = scmp.ne.s32.totalorder %s222, %s223
      %p234 = scmp.eq.s32.totalorder %s27, 0
      %p235 = por %p233, %p234
      %p236 = scmp.ne.s32.totalorder %s222, %s223
      %p237 = scmp.eq.s32.totalorder %s28, 3
      %p238 = por %p236, %p237
      %p240 = scmp.ne.s32.totalorder %s223, %s239
      %p241 = scmp.eq.s32.totalorder %s28, 0
      %p242 = por %p240, %p241
      %p243 = scmp.le.s32.totalorder 1, %s22
      %p244 = scmp.lt.s32.totalorder %s22, 5
      %p245 = pnand %p243, %p244
      %p246 = pneg %p245
      // Predicated region
      $region9: #{bert_forward.3} parent=5 // pred_check
        _
      $region10: #{bert_forward.3} parent=5 // pred_check_branch
        %248 = sbr.rel (%p245) target = $region12
      $region11: #{bert_forward.3} parent=5 // pred_region
        %s249 = ssub.s32 %s22, 1
        // Predicated region
        $region13: #{bert_forward.3} parent=11 // pred_check
          %p250 = pneg %p146
        $region14: #{bert_forward.3} parent=11 // pred_check_branch
          %252 = sbr.rel (%p250) target = $region16
        $region15: #{bert_forward.3} parent=11 // pred_region
          %s254 = ssub.s32 256, 256
          %255 = vsyncadd [#allocation13], %s254
          %s256 = sshll.u32 [#allocation12], 4
          %s257 = int_to_ptr.vmem [resolvable:$true] %s256
          %262 = dma.hbm_to_vmem [thread:$0]  %s3, 256, %s257, [#allocation13], 64, 64, 4
        $region16: #{bert_forward.3} parent=11 // pred_fallthru
          _
        // Predicated region
        $region17: #{bert_forward.3} parent=11 // pred_check
          %p263 = pneg %p167
        $region18: #{bert_forward.3} parent=11 // pred_check_branch
          %265 = sbr.rel (%p263) target = $region20
        $region19: #{bert_forward.3} parent=11 // pred_region
          %s267 = ssub.s32 16, 16
          %268 = vsyncadd [#allocation13], %s267
          %s270 = sshll.u32 [#allocation14], 4
          %s271 = int_to_ptr.vmem [resolvable:$true] %s270
          %273 = dma.hbm_to_vmem [thread:$0]  %s4, 16, %s271, [#allocation13]
        $region20: #{bert_forward.3} parent=11 // pred_fallthru
          _
        // Predicated region
        $region21: #{bert_forward.3} parent=11 // pred_check
          %p274 = pneg %p188
        $region22: #{bert_forward.3} parent=11 // pred_check_branch
          %276 = sbr.rel (%p274) target = $region24
        $region23: #{bert_forward.3} parent=11 // pred_region
          %s278 = ssub.s32 512, 512
          %279 = vsyncadd [#allocation16], %s278
          %s280 = sshll.u32 [#allocation15], 4
          %s281 = int_to_ptr.vmem [resolvable:$true] %s280
          %286 = dma.hbm_to_vmem [thread:$0]  %s5, 512, %s281, [#allocation16], 64, 64, 4
        $region24: #{bert_forward.3} parent=11 // pred_fallthru
          _
        // Predicated region
        $region25: #{bert_forward.3} parent=11 // pred_check
          %p287 = pneg %p209
        $region26: #{bert_forward.3} parent=11 // pred_check_branch
          %289 = sbr.rel (%p287) target = $region28
        $region27: #{bert_forward.3} parent=11 // pred_region
          %s291 = ssub.s32 16, 16
          %292 = vsyncadd [#allocation16], %s291
          %s294 = sshll.u32 [#allocation17], 4
          %s295 = int_to_ptr.vmem [resolvable:$true] %s294
          %297 = dma.hbm_to_vmem [thread:$0]  %s6, 16, %s295, [#allocation16]
        $region28: #{bert_forward.3} parent=11 // pred_fallthru
          _
      $region12: #{bert_forward.3} parent=5 // pred_fallthru
        _
      %p298 = scmp.lt.s32.totalorder %s22, 4
      // Predicated region
      $region29: #{bert_forward.3} parent=5 // pred_check
        %p299 = pneg %p298
      $region30: #{bert_forward.3} parent=5 // pred_check_branch
        %301 = sbr.rel (%p299) target = $region32
      $region31: #{bert_forward.3} parent=5 // pred_region
        // Predicated region
        $region33: #{bert_forward.3} parent=31 // pred_check
          %p302 = pneg %p63
        $region34: #{bert_forward.3} parent=31 // pred_check_branch
          %304 = sbr.rel (%p302) target = $region36
        $region35: #{bert_forward.3} parent=31 // pred_region
          %s305 = sand.u32 %s53, 1
          %s306 = scalar_lea.sflag [#allocation7], %s305
          %s307 = sand.u32 %s53, 1
          %s308 = smul.addr %s307, 8
          %s309 = scalar_lea.vmem [#allocation6], %s308
          %s311 = ssub.s32 128, 128
          %312 = vsyncadd %s306, %s311
          %s313 = smul.addr %s30, 2
          %s314 = sadd.s32 %s29, %s313
          %s315 = smul.addr %s314, 64
          %s316 = scalar_lea.hbm %s0, %s315
          %s317 = sshll.u32 %s309, 4
          %s318 = int_to_ptr.vmem [resolvable:$true] %s317
          %323 = dma.hbm_to_vmem [thread:$0]  %s316, 128, %s318, %s306, 64, 64, 4
        $region36: #{bert_forward.3} parent=31 // pred_fallthru
          _
        // Predicated region
        $region37: #{bert_forward.3} parent=31 // pred_check
          %p324 = pneg %p91
        $region38: #{bert_forward.3} parent=31 // pred_check_branch
          %326 = sbr.rel (%p324) target = $region40
        $region39: #{bert_forward.3} parent=31 // pred_region
          %s327 = sand.u32 %s22, 1
          %s328 = scalar_lea.sflag [#allocation10], %s327
          %s329 = sand.u32 %s81, 1
          %s330 = smul.addr %s329, 8
          %s331 = scalar_lea.vmem [#allocation9], %s330
          %s333 = ssub.s32 128, 128
          %334 = vsyncadd %s328, %s333
          %s335 = smul.addr %s30, 2
          %s336 = sadd.s32 %s31, %s335
          %s337 = smul.addr %s336, 64
          %s338 = scalar_lea.hbm %s1, %s337
          %s339 = sshll.u32 %s331, 4
          %s340 = int_to_ptr.vmem [resolvable:$true] %s339
          %345 = dma.hbm_to_vmem [thread:$0]  %s338, 128, %s340, %s328, 64, 64, 4
        $region40: #{bert_forward.3} parent=31 // pred_fallthru
          _
        // Predicated region
        $region41: #{bert_forward.3} parent=31 // pred_check
          %p346 = pneg %p119
        $region42: #{bert_forward.3} parent=31 // pred_check_branch
          %348 = sbr.rel (%p346) target = $region44
        $region43: #{bert_forward.3} parent=31 // pred_region
          %s349 = sand.u32 %s22, 1
          %s350 = scalar_lea.sflag [#allocation10], %s349
          %s351 = sand.u32 %s109, 1
          %s352 = smul.addr %s351, 8
          %s353 = scalar_lea.vmem [#allocation11], %s352
          %s355 = ssub.s32 128, 128
          %356 = vsyncadd %s350, %s355
          %s357 = smul.addr %s30, 2
          %s358 = sadd.s32 %s31, %s357
          %s359 = smul.addr %s358, 64
          %s360 = scalar_lea.hbm %s2, %s359
          %s361 = sshll.u32 %s353, 4
          %s362 = int_to_ptr.vmem [resolvable:$true] %s361
          %367 = dma.hbm_to_vmem [thread:$0]  %s360, 128, %s362, %s350, 64, 64, 4
        $region44: #{bert_forward.3} parent=31 // pred_fallthru
          _
      $region32: #{bert_forward.3} parent=5 // pred_fallthru
        _
      %p368 = scmp.le.s32.totalorder 1, %s22
      %p369 = scmp.lt.s32.totalorder %s22, 5
      %p370 = pnand %p368, %p369
      %p371 = pneg %p370
      // Predicated region
      $region45: #{bert_forward.3} parent=5 // pred_check
        _
      $region46: #{bert_forward.3} parent=5 // pred_check_branch
        %373 = sbr.rel (%p370) target = $region48
      $region47: #{bert_forward.3} parent=5 // pred_region
        %s374 = ssub.s32 %s22, 1
        %s375 = sand.u32 %s56, 1
        %s376 = scalar_lea.sflag [#allocation7], %s375
        %s377 = sand.u32 %s56, 1
        %s378 = smul.addr %s377, 8
        %s379 = scalar_lea.vmem [#allocation6], %s378
        // Predicated region
        $region49: #{bert_forward.3} parent=47 // pred_check
          %p380 = pneg %p69
        $region50: #{bert_forward.3} parent=47 // pred_check_branch
          %382 = sbr.rel (%p380) target = $region52
        $region51: #{bert_forward.3} parent=47 // pred_region
          %383 = dma.done %s376, 128
        $region52: #{bert_forward.3} parent=47 // pred_fallthru
          _
        %s384 = sand.u32 %s27, 1
        %s385 = scalar_lea.sflag [#allocation10], %s384
        %s386 = sand.u32 %s84, 1
        %s387 = smul.addr %s386, 8
        %s388 = scalar_lea.vmem [#allocation9], %s387
        // Predicated region
        $region53: #{bert_forward.3} parent=47 // pred_check
          %p389 = pneg %p97
        $region54: #{bert_forward.3} parent=47 // pred_check_branch
          %391 = sbr.rel (%p389) target = $region56
        $region55: #{bert_forward.3} parent=47 // pred_region
          %392 = dma.done %s385, 128
        $region56: #{bert_forward.3} parent=47 // pred_fallthru
          _
        %s393 = sand.u32 %s27, 1
        %s394 = scalar_lea.sflag [#allocation10], %s393
        %s395 = sand.u32 %s112, 1
        %s396 = smul.addr %s395, 8
        %s397 = scalar_lea.vmem [#allocation11], %s396
        // Predicated region
        $region57: #{bert_forward.3} parent=47 // pred_check
          %p398 = pneg %p125
        $region58: #{bert_forward.3} parent=47 // pred_check_branch
          %400 = sbr.rel (%p398) target = $region60
        $region59: #{bert_forward.3} parent=47 // pred_region
          %401 = dma.done %s394, 128
        $region60: #{bert_forward.3} parent=47 // pred_fallthru
          _
        // Predicated region
        $region61: #{bert_forward.3} parent=47 // pred_check
          %p402 = pneg %p146
        $region62: #{bert_forward.3} parent=47 // pred_check_branch
          %404 = sbr.rel (%p402) target = $region64
        $region63: #{bert_forward.3} parent=47 // pred_region
          %405 = dma.done [#allocation13], 256
        $region64: #{bert_forward.3} parent=47 // pred_fallthru
          _
        // Predicated region
        $region65: #{bert_forward.3} parent=47 // pred_check
          %p406 = pneg %p167
        $region66: #{bert_forward.3} parent=47 // pred_check_branch
          %408 = sbr.rel (%p406) target = $region68
        $region67: #{bert_forward.3} parent=47 // pred_region
          %409 = dma.done [#allocation13], 16
        $region68: #{bert_forward.3} parent=47 // pred_fallthru
          _
        // Predicated region
        $region69: #{bert_forward.3} parent=47 // pred_check
          %p410 = pneg %p188
        $region70: #{bert_forward.3} parent=47 // pred_check_branch
          %412 = sbr.rel (%p410) target = $region72
        $region71: #{bert_forward.3} parent=47 // pred_region
          %413 = dma.done [#allocation16], 512
        $region72: #{bert_forward.3} parent=47 // pred_fallthru
          _
        // Predicated region
        $region73: #{bert_forward.3} parent=47 // pred_check
          %p414 = pneg %p209
        $region74: #{bert_forward.3} parent=47 // pred_check_branch
          %416 = sbr.rel (%p414) target = $region76
        $region75: #{bert_forward.3} parent=47 // pred_region
          %417 = dma.done [#allocation16], 16
        $region76: #{bert_forward.3} parent=47 // pred_fallthru
          _
        %s418 = sand.u32 %s56, 1
        %s419 = scalar_lea.sflag [#allocation7], %s418
        %s420 = sand.u32 %s56, 1
        %s421 = smul.addr %s420, 8
        %s422 = scalar_lea.vmem [#allocation6], %s421
        %p423 = pneg %p69
        %p424 = pneg %p66
        %s425 = sand.u32 %s27, 1
        %s426 = scalar_lea.sflag [#allocation10], %s425
        %s427 = sand.u32 %s84, 1
        %s428 = smul.addr %s427, 8
        %s429 = scalar_lea.vmem [#allocation9], %s428
        %p430 = pneg %p97
        %p431 = pneg %p94
        %s432 = sand.u32 %s27, 1
        %s433 = scalar_lea.sflag [#allocation10], %s432
        %s434 = sand.u32 %s112, 1
        %s435 = smul.addr %s434, 8
        %s436 = scalar_lea.vmem [#allocation11], %s435
        %p437 = pneg %p125
        %p438 = pneg %p122
        %p439 = pneg %p146
        %p440 = pneg %p143
        %p441 = pneg %p167
        %p442 = pneg %p164
        %p443 = pneg %p188
        %p444 = pneg %p185
        %p445 = pneg %p209
        %p446 = pneg %p206
        %p447 = pneg %p235
        %p448 = pneg %p232
        %p450 = scmp.eq.s32.totalorder %s33, 0
        %p451 = scmp.eq.s32.totalorder %s34, 0
        %p452 = pnand %p450, %p451
        %p453 = pneg %p452
        // Predicated region
        $region77: #{bert_forward.3} parent=47 // pred_check
          _
        $region78: #{bert_forward.3} parent=47 // pred_check_branch
          %455 = sbr.rel (%p452) target = $region80
        $region79: #{bert_forward.3} parent=47 // pred_region
          %vm456 = vcmask 261120
          %457 = vst.msk [vmem:[#allocation5] sm:$0xff] %vm456, 0.0
          %458 = vst.msk [vmem:[#allocation5 + $0x8] sm:$0xff] %vm456, 0.0
        $region80: #{bert_forward.3} parent=47 // pred_fallthru
          _
        // Predicated region
        $region81: #{bert_forward.3} parent=47 // pred_check
          %p459 = pneg %p451
        $region82: #{bert_forward.3} parent=47 // pred_check_branch
          %461 = sbr.rel (%p459) target = $region84
        $region83: #{bert_forward.3} parent=47 // pred_region
          %vm462 = vcmask 7168
          %463 = vst.msk [vmem:[#allocation2] sm:$0xff] %vm462, -inf
          %464 = vst.msk [vmem:[#allocation2 + $0x8] sm:$0xff] %vm462, -inf
          %465 = vst.msk [vmem:[#allocation3] sm:$0xff] %vm462, 0.0
          %466 = vst.msk [vmem:[#allocation3 + $0x8] sm:$0xff] %vm462, 0.0
          %vm467 = vcmask 261120
          %468 = vst.msk [vmem:[#allocation4] sm:$0xff] %vm467, 0.0
          %469 = vst.msk [vmem:[#allocation4 + $0x8] sm:$0xff] %vm467, 0.0
        $region84: #{bert_forward.3} parent=47 // pred_fallthru
          _
        %v470 = vld [vmem:[%s379] sm:$0xf]
        %v471 = vld [vmem:[%s379 + $0x4] sm:$0xf]
        %v472 = vld [vmem:[%s388] sm:$0xf]
        %v473 = vld [vmem:[%s388 + $0x4] sm:$0xf]
        %v474 = vld [vmem:[%s397] sm:$0xf]
        %v475 = vld [vmem:[%s397 + $0x4] sm:$0xf]
        %vm476 = vcmask 261120
        %v478 = vsel %vm476, %v470, 0
        %v481 = vsel %vm476, %v472, 0
        %483 = vmatprep.subr.bf16.mxu0 0
        %484 = vmatpush1.bf16.xpose.msra.mxu0 %v481
        %485 = vmatprep.subr.bf16.mxu0 0
        %486 = vmatpush1.bf16.xpose.msra.mxu0 0
        %487 = vmatprep.subr.bf16.mxu0 0
        %488 = vmatpush1.bf16.xpose.msra.mxu0 0
        %489 = vmatprep.subr.bf16.mxu0 0
        %490 = vmatpush1.bf16.xpose.msra.mxu0 0
        %491 = vmatprep.subr.bf16.mxu0 0
        %492 = vmatpush1.bf16.xpose.msra.mxu0 0
        %493 = vmatprep.subr.bf16.mxu0 0
        %494 = vmatpush1.bf16.xpose.msra.mxu0 0
        %495 = vmatprep.subr.bf16.mxu0 0
        %496 = vmatpush1.bf16.xpose.msra.mxu0 0
        %497 = vmatprep.subr.bf16.mxu0 0
        %498 = vmatpush1.bf16.xpose.msra.mxu0 0
        %499 = vmatprep.subr.bf16.mxu0 0
        %500 = vmatpush1.bf16.xpose.msra.mxu0 0
        %501 = vmatprep.subr.bf16.mxu0 0
        %502 = vmatpush1.bf16.xpose.msra.mxu0 0
        %503 = vmatprep.subr.bf16.mxu0 0
        %504 = vmatpush1.bf16.xpose.msra.mxu0 0
        %505 = vmatprep.subr.bf16.mxu0 0
        %506 = vmatpush1.bf16.xpose.msra.mxu0 0
        %507 = vmatprep.subr.bf16.mxu0 0
        %508 = vmatpush1.bf16.xpose.msra.mxu0 0
        %509 = vmatprep.subr.bf16.mxu0 0
        %510 = vmatpush1.bf16.xpose.msra.mxu0 0
        %511 = vmatprep.subr.bf16.mxu0 0
        %512 = vmatpush1.bf16.xpose.msra.mxu0 0
        %513 = vmatprep.subr.bf16.mxu0 0
        %514 = vmatpush1.bf16.xpose.msra.mxu0 0
        %515 = vmatprep.mubr.bf16.mxu0 0
        %516 = vmatmul.mubr.bf16.gmra.mrb[0].mxu0 %v478
        %v517 = vpop.f32.mrb[0].mxu0
        %v518 = vadd.f32 0.0, %v517
        %v519 = vpop.f32.mrb[0].mxu0
        %v520 = vpop.f32.mrb[0].mxu0
        %v521 = vpop.f32.mrb[0].mxu0
        %522 = vdwg.mxu0
        %v524 = vsel %vm476, %v471, 0
        %v527 = vsel %vm476, %v473, 0
        %529 = vmatprep.subr.bf16.mxu0 0
        %530 = vmatpush1.bf16.xpose.msra.mxu0 %v527
        %531 = vmatprep.subr.bf16.mxu0 0
        %532 = vmatpush1.bf16.xpose.msra.mxu0 0
        %533 = vmatprep.subr.bf16.mxu0 0
        %534 = vmatpush1.bf16.xpose.msra.mxu0 0
        %535 = vmatprep.subr.bf16.mxu0 0
        %536 = vmatpush1.bf16.xpose.msra.mxu0 0
        %537 = vmatprep.subr.bf16.mxu0 0
        %538 = vmatpush1.bf16.xpose.msra.mxu0 0
        %539 = vmatprep.subr.bf16.mxu0 0
        %540 = vmatpush1.bf16.xpose.msra.mxu0 0
        %541 = vmatprep.subr.bf16.mxu0 0
        %542 = vmatpush1.bf16.xpose.msra.mxu0 0
        %543 = vmatprep.subr.bf16.mxu0 0
        %544 = vmatpush1.bf16.xpose.msra.mxu0 0
        %545 = vmatprep.subr.bf16.mxu0 0
        %546 = vmatpush1.bf16.xpose.msra.mxu0 0
        %547 = vmatprep.subr.bf16.mxu0 0
        %548 = vmatpush1.bf16.xpose.msra.mxu0 0
        %549 = vmatprep.subr.bf16.mxu0 0
        %550 = vmatpush1.bf16.xpose.msra.mxu0 0
        %551 = vmatprep.subr.bf16.mxu0 0
        %552 = vmatpush1.bf16.xpose.msra.mxu0 0
        %553 = vmatprep.subr.bf16.mxu0 0
        %554 = vmatpush1.bf16.xpose.msra.mxu0 0
        %555 = vmatprep.subr.bf16.mxu0 0
        %556 = vmatpush1.bf16.xpose.msra.mxu0 0
        %557 = vmatprep.subr.bf16.mxu0 0
        %558 = vmatpush1.bf16.xpose.msra.mxu0 0
        %559 = vmatprep.subr.bf16.mxu0 0
        %560 = vmatpush1.bf16.xpose.msra.mxu0 0
        %561 = vmatprep.mubr.bf16.mxu0 0
        %562 = vmatmul.mubr.bf16.gmra.mrb[0].mxu0 %v524
        %v563 = vpop.f32.mrb[0].mxu0
        %v564 = vadd.f32 0.0, %v563
        %v565 = vpop.f32.mrb[0].mxu0
        %v566 = vpop.f32.mrb[0].mxu0
        %v567 = vpop.f32.mrb[0].mxu0
        %568 = vdwg.mxu0
        %v569 = vld [vmem:[#allocation2] sm:$0xff]
        %v570 = vld [vmem:[#allocation2 + $0x8] sm:$0xff]
        %vm571 = vcmask 64512
        %v572 = vsel %vm571, %v518, -inf
        %573 = vmax.xlane.f32.xlu0 %v572
        %v574 = vpop.xlane.xlu0 %573
        %v575 = vsel %vm571, %v564, -inf
        %576 = vmax.xlane.f32.xlu0 %v575
        %v577 = vpop.xlane.xlu0 %576
        %v578 = vmax.f32 %v569, %v574
        %v579 = vmax.f32 %v570, %v577
        %v580 = vsub.f32 %v569, %v578
        %v581 = vsub.f32 %v570, %v579
        %v582 = vmul.f32 %v580, 1.442695
        %v583 = vpow.pop %v582
        %v584 = vmul.f32 %v581, 1.442695
        %v585 = vpow.pop %v584
        %587 = vset.pattern.permute.xlu0 0
        %588 = vperm.xlu0 %587, %v578
        %v589 = vpop.permute.xlu0 %588
        %592 = vset.pattern.permute.xlu0 0
        %593 = vperm.xlu0 %592, %v579
        %v594 = vpop.permute.xlu0 %593
        %v596 = vsub.f32 %v518, %v589
        %v597 = vsub.f32 %v564, %v594
        %v598 = vmul.f32 %v596, 1.442695
        %v599 = vpow.pop %v598
        %v600 = vmul.f32 %v597, 1.442695
        %v601 = vpow.pop %v600
        %v602 = vld [vmem:[#allocation3] sm:$0xff]
        %v603 = vld [vmem:[#allocation3 + $0x8] sm:$0xff]
        %v604 = vmul.f32 %v583, %v602
        %v605 = vmul.f32 %v585, %v603
        %v606 = vsel %vm571, %v599, 0.0
        %607 = vadd.xlane.f32.xlu0 %v606
        %v608 = vpop.xlane.xlu0 %607
        %v609 = vsel %vm571, %v601, 0.0
        %610 = vadd.xlane.f32.xlu0 %v609
        %v611 = vpop.xlane.xlu0 %610
        %v612 = vadd.f32 %v604, %v608
        %v613 = vadd.f32 %v605, %v611
        %vm614 = vcmask 7168
        %615 = vst.msk [vmem:[#allocation3] sm:$0xff] %vm614, %v612
        %616 = vst.msk [vmem:[#allocation3 + $0x8] sm:$0xff] %vm614, %v613
        %v617 = vld [vmem:[#allocation4] sm:$0xff]
        %v618 = vld [vmem:[#allocation4 + $0x8] sm:$0xff]
        %620 = vset.pattern.permute.xlu0 0
        %621 = vperm.xlu0 %620, %v583
        %v622 = vpop.permute.xlu0 %621
        %625 = vset.pattern.permute.xlu0 0
        %626 = vperm.xlu0 %625, %v585
        %v627 = vpop.permute.xlu0 %626
        %v629 = vmul.f32 %v622, %v617
        %v630 = vmul.f32 %v627, %v618
        %v631 = vpack.c.bf16 %v599, %v599
        %v632 = vpack.c.bf16 %v601, %v601
        %v634 = vsel %vm571, %v631, 0
        %vm636 = vcmask 1043456
        %v638 = vsel %vm636, %v474, 0
        %640 = vmatprep.subr.bf16.mxu0 0
        %641 = vmatpush1.bf16.msra.mxu0 %v638
        %642 = vmatprep.subr.bf16.mxu0 0
        %643 = vmatpush1.bf16.msra.mxu0 0
        %644 = vmatprep.subr.bf16.mxu0 0
        %645 = vmatpush1.bf16.msra.mxu0 0
        %646 = vmatprep.subr.bf16.mxu0 0
        %647 = vmatpush1.bf16.msra.mxu0 0
        %648 = vmatprep.subr.bf16.mxu0 0
        %649 = vmatpush1.bf16.msra.mxu0 0
        %650 = vmatprep.subr.bf16.mxu0 0
        %651 = vmatpush1.bf16.msra.mxu0 0
        %652 = vmatprep.subr.bf16.mxu0 0
        %653 = vmatpush1.bf16.msra.mxu0 0
        %654 = vmatprep.subr.bf16.mxu0 0
        %655 = vmatpush1.bf16.msra.mxu0 0
        %656 = vmatprep.subr.bf16.mxu0 0
        %657 = vmatpush1.bf16.msra.mxu0 0
        %658 = vmatprep.subr.bf16.mxu0 0
        %659 = vmatpush1.bf16.msra.mxu0 0
        %660 = vmatprep.subr.bf16.mxu0 0
        %661 = vmatpush1.bf16.msra.mxu0 0
        %662 = vmatprep.subr.bf16.mxu0 0
        %663 = vmatpush1.bf16.msra.mxu0 0
        %664 = vmatprep.subr.bf16.mxu0 0
        %665 = vmatpush1.bf16.msra.mxu0 0
        %666 = vmatprep.subr.bf16.mxu0 0
        %667 = vmatpush1.bf16.msra.mxu0 0
        %668 = vmatprep.subr.bf16.mxu0 0
        %669 = vmatpush1.bf16.msra.mxu0 0
        %670 = vmatprep.subr.bf16.mxu0 0
        %671 = vmatpush1.bf16.msra.mxu0 0
        %672 = vmatprep.mubr.bf16.mxu0 0
        %673 = vmatmul.mubr.bf16.gmra.mrb[0].mxu0 %v634
        %v674 = vpop.f32.mrb[0].mxu0
        %v675 = vadd.f32 0.0, %v674
        %v676 = vpop.f32.mrb[0].mxu0
        %v677 = vpop.f32.mrb[0].mxu0
        %v678 = vpop.f32.mrb[0].mxu0
        %679 = vdwg.mxu0
        %v681 = vsel %vm571, %v632, 0
        %v684 = vsel %vm636, %v475, 0
        %686 = vmatprep.subr.bf16.mxu0 0
        %687 = vmatpush1.bf16.msra.mxu0 %v684
        %688 = vmatprep.subr.bf16.mxu0 0
        %689 = vmatpush1.bf16.msra.mxu0 0
        %690 = vmatprep.subr.bf16.mxu0 0
        %691 = vmatpush1.bf16.msra.mxu0 0
        %692 = vmatprep.subr.bf16.mxu0 0
        %693 = vmatpush1.bf16.msra.mxu0 0
        %694 = vmatprep.subr.bf16.mxu0 0
        %695 = vmatpush1.bf16.msra.mxu0 0
        %696 = vmatprep.subr.bf16.mxu0 0
        %697 = vmatpush1.bf16.msra.mxu0 0
        %698 = vmatprep.subr.bf16.mxu0 0
        %699 = vmatpush1.bf16.msra.mxu0 0
        %700 = vmatprep.subr.bf16.mxu0 0
        %701 = vmatpush1.bf16.msra.mxu0 0
        %702 = vmatprep.subr.bf16.mxu0 0
        %703 = vmatpush1.bf16.msra.mxu0 0
        %704 = vmatprep.subr.bf16.mxu0 0
        %705 = vmatpush1.bf16.msra.mxu0 0
        %706 = vmatprep.subr.bf16.mxu0 0
        %707 = vmatpush1.bf16.msra.mxu0 0
        %708 = vmatprep.subr.bf16.mxu0 0
        %709 = vmatpush1.bf16.msra.mxu0 0
        %710 = vmatprep.subr.bf16.mxu0 0
        %711 = vmatpush1.bf16.msra.mxu0 0
        %712 = vmatprep.subr.bf16.mxu0 0
        %713 = vmatpush1.bf16.msra.mxu0 0
        %714 = vmatprep.subr.bf16.mxu0 0
        %715 = vmatpush1.bf16.msra.mxu0 0
        %716 = vmatprep.subr.bf16.mxu0 0
        %717 = vmatpush1.bf16.msra.mxu0 0
        %718 = vmatprep.mubr.bf16.mxu0 0
        %719 = vmatmul.mubr.bf16.gmra.mrb[0].mxu0 %v681
        %v720 = vpop.f32.mrb[0].mxu0
        %v721 = vadd.f32 0.0, %v720
        %v722 = vpop.f32.mrb[0].mxu0
        %v723 = vpop.f32.mrb[0].mxu0
        %v724 = vpop.f32.mrb[0].mxu0
        %725 = vdwg.mxu0
        %v726 = vadd.f32 %v629, %v675
        %v727 = vadd.f32 %v630, %v721
        %728 = vst.msk [vmem:[#allocation4] sm:$0xff] %vm476, %v726
        %729 = vst.msk [vmem:[#allocation4 + $0x8] sm:$0xff] %vm476, %v727
        %730 = vst.msk [vmem:[#allocation2] sm:$0xff] %vm614, %v578
        %731 = vst.msk [vmem:[#allocation2 + $0x8] sm:$0xff] %vm614, %v579
        // Predicated region
        $region85: #{bert_forward.3} parent=47 // pred_check
          %p732 = pneg %p451
        $region86: #{bert_forward.3} parent=47 // pred_check_branch
          %734 = sbr.rel (%p732) target = $region88
        $region87: #{bert_forward.3} parent=47 // pred_region
          %v735 = vld [vmem:[#allocation5] sm:$0xff]
          %v736 = vld [vmem:[#allocation5 + $0x8] sm:$0xff]
          %v737 = vld [vmem:[#allocation4] sm:$0xff]
          %v738 = vld [vmem:[#allocation4 + $0x8] sm:$0xff]
          %v739 = vld [vmem:[#allocation3] sm:$0xff]
          %v740 = vld [vmem:[#allocation3 + $0x8] sm:$0xff]
          %v741 = vrcp.pop %v739
          %v742 = vrcp.pop %v740
          %744 = vset.pattern.permute.xlu0 0
          %745 = vperm.xlu0 %744, %v741
          %v746 = vpop.permute.xlu0 %745
          %749 = vset.pattern.permute.xlu0 0
          %750 = vperm.xlu0 %749, %v742
          %v751 = vpop.permute.xlu0 %750
          %v753 = vmul.f32 %v737, %v746
          %v754 = vmul.f32 %v738, %v751
          %v755 = vadd.f32 %v735, %v753
          %v756 = vadd.f32 %v736, %v754
          %757 = vst.msk [vmem:[#allocation5] sm:$0xff] %vm476, %v755
          %758 = vst.msk [vmem:[#allocation5 + $0x8] sm:$0xff] %vm476, %v756
        $region88: #{bert_forward.3} parent=47 // pred_fallthru
          _
        %p759 = scmp.eq.s32.totalorder %s33, 3
        %p760 = pnand %p759, %p451
        %p761 = pneg %p760
        // Predicated region
        $region89: #{bert_forward.3} parent=47 // pred_check
          _
        $region90: #{bert_forward.3} parent=47 // pred_check_branch
          %763 = sbr.rel (%p760) target = $region92
        $region91: #{bert_forward.3} parent=47 // pred_region
          %v764 = vld [vmem:[#allocation5] sm:$0xff]
          %v765 = vld [vmem:[#allocation5 + $0x8] sm:$0xff]
          %v766 = vpack.c.bf16 %v765, %v764
          %v767 = vld [vmem:[#allocation12] sm:$0xf]
          %v768 = vld [vmem:[#allocation12 + $0x4] sm:$0xf]
          %v769 = vld [vmem:[#allocation12 + $0x8] sm:$0xf]
          %v770 = vld [vmem:[#allocation12 + $0xc] sm:$0xf]
          %v771 = vld [vmem:[#allocation14] sm:$0x1]
          %v773 = vlaneseq
          %v774 = vshrl.u32 %v773, 7
          %v775 = vsub.s32 0, %v774
          %v776 = vrot.slane %v771, %v775
          %v782 = vunpack.c.l.b16 %v767
          %v783 = vunpack.c.l.b16 %v768
          %v784 = vunpack.c.l.b16 %v769
          %v785 = vunpack.c.l.b16 %v770
          %v786 = vpack.c.b16 %v783, %v782
          %v787 = vpack.c.b16 %v785, %v784
          %v791 = vsel %vm476, %v766, 0
          %793 = vmatprep.subr.bf16.mxu0 0
          %794 = vmatpush1.bf16.msra.mxu0 %v786
          %795 = vmatprep.subr.bf16.mxu0 0
          %796 = vmatpush1.bf16.msra.mxu0 %v787
          %797 = vmatprep.subr.bf16.mxu0 0
          %798 = vmatpush1.bf16.msra.mxu0 0
          %799 = vmatprep.subr.bf16.mxu0 0
          %800 = vmatpush1.bf16.msra.mxu0 0
          %801 = vmatprep.subr.bf16.mxu0 0
          %802 = vmatpush1.bf16.msra.mxu0 0
          %803 = vmatprep.subr.bf16.mxu0 0
          %804 = vmatpush1.bf16.msra.mxu0 0
          %805 = vmatprep.subr.bf16.mxu0 0
          %806 = vmatpush1.bf16.msra.mxu0 0
          %807 = vmatprep.subr.bf16.mxu0 0
          %808 = vmatpush1.bf16.msra.mxu0 0
          %809 = vmatprep.subr.bf16.mxu0 0
          %810 = vmatpush1.bf16.msra.mxu0 0
          %811 = vmatprep.subr.bf16.mxu0 0
          %812 = vmatpush1.bf16.msra.mxu0 0
          %813 = vmatprep.subr.bf16.mxu0 0
          %814 = vmatpush1.bf16.msra.mxu0 0
          %815 = vmatprep.subr.bf16.mxu0 0
          %816 = vmatpush1.bf16.msra.mxu0 0
          %817 = vmatprep.subr.bf16.mxu0 0
          %818 = vmatpush1.bf16.msra.mxu0 0
          %819 = vmatprep.subr.bf16.mxu0 0
          %820 = vmatpush1.bf16.msra.mxu0 0
          %821 = vmatprep.subr.bf16.mxu0 0
          %822 = vmatpush1.bf16.msra.mxu0 0
          %823 = vmatprep.subr.bf16.mxu0 0
          %824 = vmatpush1.bf16.msra.mxu0 0
          %825 = vmatprep.mubr.bf16.mxu0 0
          %826 = vmatmul.mubr.bf16.gmra.mrb[0].mxu0 %v791
          %v827 = vpop.f32.mrb[0].mxu0
          %v828 = vadd.f32 %v776, %v827
          %v829 = vpop.f32.mrb[0].mxu0
          %v830 = vpop.f32.mrb[0].mxu0
          %v831 = vadd.f32 %v776, %v830
          %v832 = vpop.f32.mrb[0].mxu0
          %833 = vdwg.mxu0
          %v834 = vmax.f32 %v828, 0.0
          %v835 = vmax.f32 %v831, 0.0
          %v836 = vpack.c.bf16 %v835, %v834
          %v837 = vld [vmem:[#allocation15] sm:$0xf]
          %v838 = vld [vmem:[#allocation15 + $0x4] sm:$0xf]
          %v839 = vld [vmem:[#allocation15 + $0x8] sm:$0xf]
          %v840 = vld [vmem:[#allocation15 + $0xc] sm:$0xf]
          %v841 = vld [vmem:[#allocation15 + $0x10] sm:$0xf]
          %v842 = vld [vmem:[#allocation15 + $0x14] sm:$0xf]
          %v843 = vld [vmem:[#allocation15 + $0x18] sm:$0xf]
          %v844 = vld [vmem:[#allocation15 + $0x1c] sm:$0xf]
          %v845 = vld [vmem:[#allocation17] sm:$0x1]
          %v847 = vlaneseq
          %v848 = vshrl.u32 %v847, 7
          %v849 = vsub.s32 0, %v848
          %v850 = vrot.slane %v845, %v849
          %v860 = vunpack.c.l.b16 %v837
          %v861 = vunpack.c.l.b16 %v838
          %v862 = vunpack.c.l.b16 %v839
          %v863 = vunpack.c.l.b16 %v840
          %v864 = vunpack.c.l.b16 %v841
          %v865 = vunpack.c.l.b16 %v842
          %v866 = vunpack.c.l.b16 %v843
          %v867 = vunpack.c.l.b16 %v844
          %v868 = vpack.c.b16 %v861, %v860
          %v869 = vpack.c.b16 %v863, %v862
          %v870 = vpack.c.b16 %v865, %v864
          %v871 = vpack.c.b16 %v867, %v866
          %vm876 = vcmask 523264
          %v878 = vsel %vm876, %v836, 0
          %880 = vmatprep.subr.bf16.mxu0 0
          %881 = vmatpush1.bf16.msra.mxu0 %v868
          %882 = vmatprep.subr.bf16.mxu0 0
          %883 = vmatpush1.bf16.msra.mxu0 %v869
          %884 = vmatprep.subr.bf16.mxu0 0
          %885 = vmatpush1.bf16.msra.mxu0 %v870
          %886 = vmatprep.subr.bf16.mxu0 0
          %887 = vmatpush1.bf16.msra.mxu0 %v871
          %888 = vmatprep.subr.bf16.mxu0 0
          %889 = vmatpush1.bf16.msra.mxu0 0
          %890 = vmatprep.subr.bf16.mxu0 0
          %891 = vmatpush1.bf16.msra.mxu0 0
          %892 = vmatprep.subr.bf16.mxu0 0
          %893 = vmatpush1.bf16.msra.mxu0 0
          %894 = vmatprep.subr.bf16.mxu0 0
          %895 = vmatpush1.bf16.msra.mxu0 0
          %896 = vmatprep.subr.bf16.mxu0 0
          %897 = vmatpush1.bf16.msra.mxu0 0
          %898 = vmatprep.subr.bf16.mxu0 0
          %899 = vmatpush1.bf16.msra.mxu0 0
          %900 = vmatprep.subr.bf16.mxu0 0
          %901 = vmatpush1.bf16.msra.mxu0 0
          %902 = vmatprep.subr.bf16.mxu0 0
          %903 = vmatpush1.bf16.msra.mxu0 0
          %904 = vmatprep.subr.bf16.mxu0 0
          %905 = vmatpush1.bf16.msra.mxu0 0
          %906 = vmatprep.subr.bf16.mxu0 0
          %907 = vmatpush1.bf16.msra.mxu0 0
          %908 = vmatprep.subr.bf16.mxu0 0
          %909 = vmatpush1.bf16.msra.mxu0 0
          %910 = vmatprep.subr.bf16.mxu0 0
          %911 = vmatpush1.bf16.msra.mxu0 0
          %912 = vmatprep.mubr.bf16.mxu0 0
          %913 = vmatmul.mubr.bf16.gmra.mrb[0].mxu0 %v878
          %v914 = vpop.f32.mrb[0].mxu0
          %v915 = vadd.f32 %v850, %v914
          %v916 = vpop.f32.mrb[0].mxu0
          %v917 = vpop.f32.mrb[0].mxu0
          %v918 = vadd.f32 %v850, %v917
          %v919 = vpop.f32.mrb[0].mxu0
          %920 = vdwg.mxu0
          %v921 = vpack.c.bf16 %v915, %v915
          %v922 = vpack.c.bf16 %v918, %v918
          %vm923 = vcmask 257024
          %924 = vst.msk [vmem:[#allocation18] sm:$0xf] %vm923, %v921
          %925 = vst.msk [vmem:[#allocation18 + $0x4] sm:$0xf] %vm923, %v922
        $region92: #{bert_forward.3} parent=47 // pred_fallthru
          _
        // Predicated region
        $region93: #{bert_forward.3} parent=47 // pred_check
          %p926 = pneg %p232
        $region94: #{bert_forward.3} parent=47 // pred_check_branch
          %928 = sbr.rel (%p926) target = $region96
        $region95: #{bert_forward.3} parent=47 // pred_region
          %s930 = ssub.s32 128, 128
          %931 = vsyncadd [#allocation8], %s930
          %s932 = smul.addr %s32, 64
          %s933 = scalar_lea.hbm %s7, %s932
          %s934 = sshll.u32 [#allocation18], 4
          %s935 = int_to_ptr.vmem [resolvable:$true] %s934
          %940 = dma.vmem_to_hbm [thread:$0]  %s935, 128, %s933, [#allocation8], 64, 64, 4
        $region96: #{bert_forward.3} parent=47 // pred_fallthru
          _
        // Predicated region
        $region97: #{bert_forward.3} parent=47 // pred_check
          %p941 = pneg %p232
        $region98: #{bert_forward.3} parent=47 // pred_check_branch
          %943 = sbr.rel (%p941) target = $region100
        $region99: #{bert_forward.3} parent=47 // pred_region
          %944 = dma.done [#allocation8], 128
        $region100: #{bert_forward.3} parent=47 // pred_fallthru
          _
      $region48: #{bert_forward.3} parent=5 // pred_fallthru
        _
      %p945 = scmp.le.s32.totalorder 2, %s22
      // Predicated region
      $region101: #{bert_forward.3} parent=5 // pred_check
        %p946 = pneg %p945
      $region102: #{bert_forward.3} parent=5 // pred_check_branch
        %948 = sbr.rel (%p946) target = $region104
      $region103: #{bert_forward.3} parent=5 // pred_region
        %s949 = ssub.s32 %s22, 2
      $region104: #{bert_forward.3} parent=5 // pred_fallthru
        _
    $region6: #{bert_forward.3} parent=1 // loop_footer
      %s26 = sadd.s32 1, %s22
    $region7: #{bert_forward.3} parent=1 // loop_footer_branch
      %21 = sbr.rel target = $region3
    $region8: #{bert_forward.3} parent=1 // loop_exit
      _
    %950 = vsyncpa [#allocation7], 1
    %s951 = scalar_lea.sflag [#allocation7], 1
    %952 = vsyncpa %s951, 1
    %953 = vsyncpa [#allocation10], 1
    %s954 = scalar_lea.sflag [#allocation10], 1
    %955 = vsyncpa %s954, 1
    %956 = vsyncpa [#allocation13], 1
    %957 = vsyncpa [#allocation16], 1
    %958 = vsyncpa [#allocation8], 1
    %s959 = scalar_lea.sflag [#allocation8], 1
    %960 = vsyncpa %s959, 1

</llo_original>
